<compile_context>
chip_gen: v7x
topology: tpu7x:2x2x1
jax: 0.10.0
libtpu: 0.0.40
codegen_flags: <defaults>
</compile_context>

<pallas_src>
import functools

import jax
import jax.numpy as jnp
from jax import lax
from jax.experimental import pallas as pl
from jax.experimental.pallas import tpu as pltpu


def _realnvp_kernel(n_flows, n_half,
                    xa_ref, xb_ref, w1_ref, b1_ref, w2_ref, b2_ref,
                    wst_ref, bst_ref, xao_ref, xbo_ref, ldj_ref):
    # Activations are [features, TB]: batch on the lane axis.
    cd = w1_ref.dtype                       # compute dtype (weights pre-cast)
    a = xa_ref[...]                         # [n_half, TB] f32
    b = xb_ref[...]                         # [n_half, TB] f32
    ldj = jnp.zeros_like(a)

    def flow_body(k, a, b, ldj):
        # fc1: [n_hidden, n_half] @ [n_half, TB] -> [n_hidden, TB]
        h = jnp.dot(w1_ref[k], a.astype(cd),
                    preferred_element_type=jnp.float32) + b1_ref[k]
        h = jnp.maximum(h, 0.0)
        # fc2: [n_hidden, n_hidden] @ [n_hidden, TB]
        h = jnp.dot(w2_ref[k], h.astype(cd),
                    preferred_element_type=jnp.float32) + b2_ref[k]
        h = jnp.maximum(h, 0.0)
        # fused s/t projection: [2*n_half, n_hidden] @ [n_hidden, TB]
        st = jnp.dot(wst_ref[k], h.astype(cd),
                     preferred_element_type=jnp.float32) + bst_ref[k]
        s = jnp.tanh(st[:n_half, :])
        t = st[n_half:, :]
        # affine coupling + swap: x = cat([x_b, x_a])
        return jnp.exp(s) * b + t, a, ldj + s

    if n_flows <= 16:
        for k in range(n_flows):            # static unroll for short chains
            a, b, ldj = flow_body(k, a, b, ldj)
    else:
        a, b, ldj = lax.fori_loop(
            0, n_flows, lambda k, c: flow_body(k, *c), (a, b, ldj), unroll=2)

    # Three lane-dense full-ref stores; concat/transpose happen in the wrapper.
    xao_ref[...] = a
    xbo_ref[...] = b
    ldj_ref[...] = ldj


def realnvp_forward(x, params, *, batch_tile=1024, compute_dtype=jnp.bfloat16):
    """x: [batch, data_dim] float32. params: dict of stacked per-flow weights.

    Weights are stored as [in, out] per flow (transpose of torch nn.Linear);
    the wrapper re-transposes them once to [out, in] for the batch-in-lanes
    layout and pre-casts the matmul operands to `compute_dtype`.
    """
    batch, data_dim = x.shape
    n_flows, n_half, n_hidden = params["w1"].shape
    assert data_dim == 2 * n_half

    # ---- weight preparation (transpose to [out, in], fuse s/t, pre-cast) ----
    w1t = jnp.swapaxes(params["w1"], 1, 2).astype(compute_dtype)   # [F,H,h]
    w2t = jnp.swapaxes(params["w2"], 1, 2).astype(compute_dtype)   # [F,H,H]
    wst = jnp.concatenate([params["ws"], params["wt"]], axis=-1)    # [F,H,2h]
    wstt = jnp.swapaxes(wst, 1, 2).astype(compute_dtype)            # [F,2h,H]
    b1t = jnp.swapaxes(params["b1"], 1, 2)                          # [F,H,1] f32
    b2t = jnp.swapaxes(params["b2"], 1, 2)                          # [F,H,1] f32
    bstt = jnp.swapaxes(
        jnp.concatenate([params["bs"], params["bt"]], axis=-1), 1, 2)  # [F,2h,1]

    # ---- batch tiling: batch on the lane axis, tile a multiple of 128 ----
    lane = 128
    tb = max(lane, (int(batch_tile) // lane) * lane)
    tb = min(tb, ((batch + lane - 1) // lane) * lane)   # don't over-pad tiny batches
    n_lane_tiles = (batch + lane - 1) // lane
    if n_lane_tiles >= 2:
        # >=2 grid steps so the "parallel" axis can shard across v7x's 2 TCs.
        tb = min(tb, ((n_lane_tiles + 1) // 2) * lane)
    padded = ((batch + tb - 1) // tb) * tb
    grid = (padded // tb,)

    xT = x.T                                             # [data_dim, batch]
    if padded != batch:
        xT = jnp.pad(xT, ((0, 0), (0, padded - batch)))
    x_a = xT[:n_half, :]                                 # [n_half, padded]
    x_b = xT[n_half:, :]                                 # [n_half, padded]

    # ---- VMEM budget (generation-aware clamp) ----
    weights = (w1t, b1t, w2t, b2t, wstt, bstt)
    weight_bytes = int(sum(int(w.size) * w.dtype.itemsize for w in weights))
    io_tile_bytes = tb * 4 * (5 * n_half + 2 * n_hidden)
    vmem_need = 2 * weight_bytes + 2 * io_tile_bytes + (2 << 20)
    try:
        vmem_cap = int(pltpu.get_tpu_info().vmem_capacity_bytes)
    except Exception:
        vmem_cap = 64 << 20                              # conservative (v7x per-TC)
    vmem_limit = int(min(max(vmem_need, 16 << 20), int(0.85 * vmem_cap)))

    flops = n_flows * padded * (2 * n_half * n_hidden
                                + 2 * n_hidden * n_hidden
                                + 2 * n_hidden * (2 * n_half)
                                + 6 * n_half)
    transcendentals = n_flows * padded * 2 * n_half
    bytes_accessed = padded * 4 * (data_dim + data_dim + n_half) + weight_bytes

    kernel = functools.partial(_realnvp_kernel, n_flows, n_half)

    def io_spec():
        # [n_half, TB] tile: lane-dense (TB multiple of 128 or the full axis).
        return pl.BlockSpec((n_half, tb), lambda i: (0, i))

    def weight_spec(arr):
        # Full stacked array as one block; constant index -> stays VMEM-resident.
        return pl.BlockSpec(arr.shape, lambda i: (0, 0, 0))

    xa_o, xb_o, ldj_t = pl.pallas_call(
        kernel,
        grid=grid,
        out_shape=(
            jax.ShapeDtypeStruct((n_half, padded), jnp.float32),
            jax.ShapeDtypeStruct((n_half, padded), jnp.float32),
            jax.ShapeDtypeStruct((n_half, padded), jnp.float32),
        ),
        in_specs=[
            io_spec(),                                   # x_a^T
            io_spec(),                                   # x_b^T
            weight_spec(w1t), weight_spec(b1t),
            weight_spec(w2t), weight_spec(b2t),
            weight_spec(wstt), weight_spec(bstt),
        ],
        out_specs=(io_spec(), io_spec(), io_spec()),
        compiler_params=pltpu.CompilerParams(
            dimension_semantics=("parallel",),
            vmem_limit_bytes=vmem_limit),
        cost_estimate=pl.CostEstimate(
            flops=int(flops),
            transcendentals=int(transcendentals),
            bytes_accessed=int(bytes_accessed)),
    )(x_a, x_b, w1t, b1t, w2t, b2t, wstt, bstt)

    out_x = jnp.concatenate([xa_o, xb_o], axis=0).T      # [padded, data_dim]
    ldj = ldj_t.T                                        # [padded, n_half]
    if padded != batch:
        out_x = out_x[:batch]
        ldj = ldj[:batch]
    return out_x, ldj


def init_params(key, n_flows, data_dim, n_hidden):
    n_half = data_dim // 2
    ks = jax.random.split(key, 8)
    scale = 0.2
    return {
        "w1": scale * jax.random.normal(ks[0], (n_flows, n_half, n_hidden), jnp.float32),
        "b1": scale * jax.random.normal(ks[1], (n_flows, 1, n_hidden), jnp.float32),
        "w2": scale * jax.random.normal(ks[2], (n_flows, n_hidden, n_hidden), jnp.float32),
        "b2": scale * jax.random.normal(ks[3], (n_flows, 1, n_hidden), jnp.float32),
        "ws": scale * jax.random.normal(ks[4], (n_flows, n_hidden, n_half), jnp.float32),
        "bs": scale * jax.random.normal(ks[5], (n_flows, 1, n_half), jnp.float32),
        "wt": scale * jax.random.normal(ks[6], (n_flows, n_hidden, n_half), jnp.float32),
        "bt": scale * jax.random.normal(ks[7], (n_flows, 1, n_half), jnp.float32),
    }


def realnvp_reference(x, params):
    """Pure-JAX reference mirroring the PyTorch forward exactly."""
    n_flows = params["w1"].shape[0]
    n_half = x.shape[1] // 2
    ldj = jnp.zeros((x.shape[0], n_half), jnp.float32)
    for k in range(n_flows):
        x_a = x[:, :n_half]
        x_b = x[:, n_half:]
        h = jax.nn.relu(x_a @ params["w1"][k] + params["b1"][k])
        h = jax.nn.relu(h @ params["w2"][k] + params["b2"][k])
        s = jnp.tanh(h @ params["ws"][k] + params["bs"][k])
        t = h @ params["wt"][k] + params["bt"][k]
        x_b = jnp.exp(s) * x_b + t
        x = jnp.concatenate([x_b, x_a], axis=1)
        ldj = ldj + s
    return x, ldj


if __name__ == "__main__":
    n_flows, data_dim, n_hidden = 4, 8, 32
    batch = 8

    key = jax.random.PRNGKey(0)
    k_param, k_x = jax.random.split(key)
    params = init_params(k_param, n_flows, data_dim, n_hidden)
    x = jax.random.normal(k_x, (batch, data_dim), jnp.float32)
    ref_x, ref_ldj = realnvp_reference(x, params)

    # f32 MXU-operand path: tight match against the reference.
    out_x, ldj = realnvp_forward(x, params, compute_dtype=jnp.float32)
    jax.block_until_ready((out_x, ldj))
    assert jnp.allclose(out_x, ref_x, atol=1e-4, rtol=1e-4)
    assert jnp.allclose(ldj, ref_ldj, atol=1e-4, rtol=1e-4)

    # Default bf16 MXU-operand path (f32 accumulation): loose sanity tolerance.
    out_bf, ldj_bf = realnvp_forward(x, params)
    jax.block_until_ready((out_bf, ldj_bf))
    assert jnp.allclose(out_bf, ref_x, atol=1e-1, rtol=1e-1)
    assert jnp.allclose(ldj_bf, ref_ldj, atol=1e-1, rtol=1e-1)

    # Padding + multi-step grid path (batch spans >1 lane tile -> grid=(2,)).
    x2 = jax.random.normal(jax.random.PRNGKey(2), (160, data_dim), jnp.float32)
    out2, ldj2 = realnvp_forward(x2, params, compute_dtype=jnp.float32)
    jax.block_until_ready((out2, ldj2))
    ref2_x, ref2_l = realnvp_reference(x2, params)
    assert jnp.allclose(out2, ref2_x, atol=1e-4, rtol=1e-4)
    assert jnp.allclose(ldj2, ref2_l, atol=1e-4, rtol=1e-4)

    print("KERNEL_OK")
</pallas_src>

<mosaic_0001>
module attributes {stable_mosaic.version = 11 : i64} {
  func.func @_realnvp_kernel(%arg0: i32, %arg1: memref<4x128xf32, #tpu.memory_space<vmem>>, %arg2: memref<4x128xf32, #tpu.memory_space<vmem>>, %arg3: memref<4x32x4xf32, #tpu.memory_space<vmem>>, %arg4: memref<4x32x1xf32, #tpu.memory_space<vmem>>, %arg5: memref<4x32x32xf32, #tpu.memory_space<vmem>>, %arg6: memref<4x32x1xf32, #tpu.memory_space<vmem>>, %arg7: memref<4x8x32xf32, #tpu.memory_space<vmem>>, %arg8: memref<4x8x1xf32, #tpu.memory_space<vmem>>, %arg9: memref<4x128xf32, #tpu.memory_space<vmem>>, %arg10: memref<4x128xf32, #tpu.memory_space<vmem>>, %arg11: memref<4x128xf32, #tpu.memory_space<vmem>>) attributes {dimension_semantics = [#tpu.dimension_semantics<parallel>], iteration_bounds = array<i64: 1>, scalar_prefetch = 0 : i64, scratch_operands = 0 : i64, tpu.core_type = #tpu.core_type<tc>, window_params = [{transform_indices = @transform_0, window_bounds = array<i64: 4, 128>}, {transform_indices = @transform_1, window_bounds = array<i64: 4, 128>}, {pipeline_mode = #tpu.pipeline_mode<synchronous>, transform_indices = @transform_2, window_bounds = array<i64: 4, 32, 4>}, {pipeline_mode = #tpu.pipeline_mode<synchronous>, transform_indices = @transform_3, window_bounds = array<i64: 4, 32, 1>}, {pipeline_mode = #tpu.pipeline_mode<synchronous>, transform_indices = @transform_4, window_bounds = array<i64: 4, 32, 32>}, {pipeline_mode = #tpu.pipeline_mode<synchronous>, transform_indices = @transform_5, window_bounds = array<i64: 4, 32, 1>}, {pipeline_mode = #tpu.pipeline_mode<synchronous>, transform_indices = @transform_6, window_bounds = array<i64: 4, 8, 32>}, {pipeline_mode = #tpu.pipeline_mode<synchronous>, transform_indices = @transform_7, window_bounds = array<i64: 4, 8, 1>}, {transform_indices = @transform_8, window_bounds = array<i64: 4, 128>}, {transform_indices = @transform_9, window_bounds = array<i64: 4, 128>}, {transform_indices = @transform_10, window_bounds = array<i64: 4, 128>}]} {
    %c0 = arith.constant 0 : index
    %c0_0 = arith.constant 0 : index
    %0 = vector.load %arg1[%c0, %c0_0] : memref<4x128xf32, #tpu.memory_space<vmem>>, vector<4x128xf32>
    %c0_1 = arith.constant 0 : index
    %c0_2 = arith.constant 0 : index
    %1 = vector.load %arg2[%c0_1, %c0_2] : memref<4x128xf32, #tpu.memory_space<vmem>>, vector<4x128xf32>
    %cst = arith.constant 0.000000e+00 : f32
    %2 = vector.broadcast %cst : f32 to vector<4x128xf32>
    %c0_3 = arith.constant 0 : index
    %c0_4 = arith.constant 0 : index
    %c0_5 = arith.constant 0 : index
    %3 = vector.load %arg3[%c0_3, %c0_4, %c0_5] : memref<4x32x4xf32, #tpu.memory_space<vmem>>, vector<1x32x4xf32>
    %4 = vector.shape_cast %3 : vector<1x32x4xf32> to vector<32x4xf32>
    %cst_6 = arith.constant dense<0.000000e+00> : vector<32x128xf32>
    %5 = tpu.matmul %4, %0, %cst_6 {dimension_numbers = #tpu.dot_dimension_numbers<[1], [0], [0], [1], [0, 0, 1, 1], [], []>} : vector<32x4xf32>, vector<4x128xf32>, vector<32x128xf32> -> vector<32x128xf32>
    %c0_7 = arith.constant 0 : index
    %c0_8 = arith.constant 0 : index
    %c0_9 = arith.constant 0 : index
    %6 = vector.load %arg4[%c0_7, %c0_8, %c0_9] : memref<4x32x1xf32, #tpu.memory_space<vmem>>, vector<1x32x1xf32>
    %7 = vector.shape_cast %6 : vector<1x32x1xf32> to vector<32x1xf32>
    %8 = vector.broadcast %7 : vector<32x1xf32> to vector<32x128xf32>
    %9 = arith.addf %5, %8 : vector<32x128xf32>
    %cst_10 = arith.constant 0.000000e+00 : f32
    %10 = vector.broadcast %cst_10 : f32 to vector<32x128xf32>
    %11 = arith.maximumf %9, %10 : vector<32x128xf32>
    %c0_11 = arith.constant 0 : index
    %c0_12 = arith.constant 0 : index
    %c0_13 = arith.constant 0 : index
    %12 = vector.load %arg5[%c0_11, %c0_12, %c0_13] : memref<4x32x32xf32, #tpu.memory_space<vmem>>, vector<1x32x32xf32>
    %13 = vector.shape_cast %12 : vector<1x32x32xf32> to vector<32x32xf32>
    %cst_14 = arith.constant dense<0.000000e+00> : vector<32x128xf32>
    %14 = tpu.matmul %13, %11, %cst_14 {dimension_numbers = #tpu.dot_dimension_numbers<[1], [0], [0], [1], [0, 0, 1, 1], [], []>} : vector<32x32xf32>, vector<32x128xf32>, vector<32x128xf32> -> vector<32x128xf32>
    %c0_15 = arith.constant 0 : index
    %c0_16 = arith.constant 0 : index
    %c0_17 = arith.constant 0 : index
    %15 = vector.load %arg6[%c0_15, %c0_16, %c0_17] : memref<4x32x1xf32, #tpu.memory_space<vmem>>, vector<1x32x1xf32>
    %16 = vector.shape_cast %15 : vector<1x32x1xf32> to vector<32x1xf32>
    %17 = vector.broadcast %16 : vector<32x1xf32> to vector<32x128xf32>
    %18 = arith.addf %14, %17 : vector<32x128xf32>
    %cst_18 = arith.constant 0.000000e+00 : f32
    %19 = vector.broadcast %cst_18 : f32 to vector<32x128xf32>
    %20 = arith.maximumf %18, %19 : vector<32x128xf32>
    %c0_19 = arith.constant 0 : index
    %c0_20 = arith.constant 0 : index
    %c0_21 = arith.constant 0 : index
    %21 = vector.load %arg7[%c0_19, %c0_20, %c0_21] : memref<4x8x32xf32, #tpu.memory_space<vmem>>, vector<1x8x32xf32>
    %22 = vector.shape_cast %21 : vector<1x8x32xf32> to vector<8x32xf32>
    %cst_22 = arith.constant dense<0.000000e+00> : vector<8x128xf32>
    %23 = tpu.matmul %22, %20, %cst_22 {dimension_numbers = #tpu.dot_dimension_numbers<[1], [0], [0], [1], [0, 0, 1, 1], [], []>} : vector<8x32xf32>, vector<32x128xf32>, vector<8x128xf32> -> vector<8x128xf32>
    %c0_23 = arith.constant 0 : index
    %c0_24 = arith.constant 0 : index
    %c0_25 = arith.constant 0 : index
    %24 = vector.load %arg8[%c0_23, %c0_24, %c0_25] : memref<4x8x1xf32, #tpu.memory_space<vmem>>, vector<1x8x1xf32>
    %25 = vector.shape_cast %24 : vector<1x8x1xf32> to vector<8x1xf32>
    %26 = vector.broadcast %25 : vector<8x1xf32> to vector<8x128xf32>
    %27 = arith.addf %23, %26 : vector<8x128xf32>
    %28 = vector.extract_strided_slice %27 {offsets = [0, 0], sizes = [4, 128], strides = [1, 1]} : vector<8x128xf32> to vector<4x128xf32>
    %29 = math.tanh %28 : vector<4x128xf32>
    %30 = vector.extract_strided_slice %27 {offsets = [4, 0], sizes = [4, 128], strides = [1, 1]} : vector<8x128xf32> to vector<4x128xf32>
    %31 = math.exp %29 : vector<4x128xf32>
    %32 = arith.mulf %31, %1 : vector<4x128xf32>
    %33 = arith.addf %32, %30 : vector<4x128xf32>
    %34 = arith.addf %2, %29 : vector<4x128xf32>
    %c1 = arith.constant 1 : index
    %c0_26 = arith.constant 0 : index
    %c0_27 = arith.constant 0 : index
    %35 = vector.load %arg3[%c1, %c0_26, %c0_27] : memref<4x32x4xf32, #tpu.memory_space<vmem>>, vector<1x32x4xf32>
    %36 = vector.shape_cast %35 : vector<1x32x4xf32> to vector<32x4xf32>
    %cst_28 = arith.constant dense<0.000000e+00> : vector<32x128xf32>
    %37 = tpu.matmul %36, %33, %cst_28 {dimension_numbers = #tpu.dot_dimension_numbers<[1], [0], [0], [1], [0, 0, 1, 1], [], []>} : vector<32x4xf32>, vector<4x128xf32>, vector<32x128xf32> -> vector<32x128xf32>
    %c1_29 = arith.constant 1 : index
    %c0_30 = arith.constant 0 : index
    %c0_31 = arith.constant 0 : index
    %38 = vector.load %arg4[%c1_29, %c0_30, %c0_31] : memref<4x32x1xf32, #tpu.memory_space<vmem>>, vector<1x32x1xf32>
    %39 = vector.shape_cast %38 : vector<1x32x1xf32> to vector<32x1xf32>
    %40 = vector.broadcast %39 : vector<32x1xf32> to vector<32x128xf32>
    %41 = arith.addf %37, %40 : vector<32x128xf32>
    %cst_32 = arith.constant 0.000000e+00 : f32
    %42 = vector.broadcast %cst_32 : f32 to vector<32x128xf32>
    %43 = arith.maximumf %41, %42 : vector<32x128xf32>
    %c1_33 = arith.constant 1 : index
    %c0_34 = arith.constant 0 : index
    %c0_35 = arith.constant 0 : index
    %44 = vector.load %arg5[%c1_33, %c0_34, %c0_35] : memref<4x32x32xf32, #tpu.memory_space<vmem>>, vector<1x32x32xf32>
    %45 = vector.shape_cast %44 : vector<1x32x32xf32> to vector<32x32xf32>
    %cst_36 = arith.constant dense<0.000000e+00> : vector<32x128xf32>
    %46 = tpu.matmul %45, %43, %cst_36 {dimension_numbers = #tpu.dot_dimension_numbers<[1], [0], [0], [1], [0, 0, 1, 1], [], []>} : vector<32x32xf32>, vector<32x128xf32>, vector<32x128xf32> -> vector<32x128xf32>
    %c1_37 = arith.constant 1 : index
    %c0_38 = arith.constant 0 : index
    %c0_39 = arith.constant 0 : index
    %47 = vector.load %arg6[%c1_37, %c0_38, %c0_39] : memref<4x32x1xf32, #tpu.memory_space<vmem>>, vector<1x32x1xf32>
    %48 = vector.shape_cast %47 : vector<1x32x1xf32> to vector<32x1xf32>
    %49 = vector.broadcast %48 : vector<32x1xf32> to vector<32x128xf32>
    %50 = arith.addf %46, %49 : vector<32x128xf32>
    %cst_40 = arith.constant 0.000000e+00 : f32
    %51 = vector.broadcast %cst_40 : f32 to vector<32x128xf32>
    %52 = arith.maximumf %50, %51 : vector<32x128xf32>
    %c1_41 = arith.constant 1 : index
    %c0_42 = arith.constant 0 : index
    %c0_43 = arith.constant 0 : index
    %53 = vector.load %arg7[%c1_41, %c0_42, %c0_43] : memref<4x8x32xf32, #tpu.memory_space<vmem>>, vector<1x8x32xf32>
    %54 = vector.shape_cast %53 : vector<1x8x32xf32> to vector<8x32xf32>
    %cst_44 = arith.constant dense<0.000000e+00> : vector<8x128xf32>
    %55 = tpu.matmul %54, %52, %cst_44 {dimension_numbers = #tpu.dot_dimension_numbers<[1], [0], [0], [1], [0, 0, 1, 1], [], []>} : vector<8x32xf32>, vector<32x128xf32>, vector<8x128xf32> -> vector<8x128xf32>
    %c1_45 = arith.constant 1 : index
    %c0_46 = arith.constant 0 : index
    %c0_47 = arith.constant 0 : index
    %56 = vector.load %arg8[%c1_45, %c0_46, %c0_47] : memref<4x8x1xf32, #tpu.memory_space<vmem>>, vector<1x8x1xf32>
    %57 = vector.shape_cast %56 : vector<1x8x1xf32> to vector<8x1xf32>
    %58 = vector.broadcast %57 : vector<8x1xf32> to vector<8x128xf32>
    %59 = arith.addf %55, %58 : vector<8x128xf32>
    %60 = vector.extract_strided_slice %59 {offsets = [0, 0], sizes = [4, 128], strides = [1, 1]} : vector<8x128xf32> to vector<4x128xf32>
    %61 = math.tanh %60 : vector<4x128xf32>
    %62 = vector.extract_strided_slice %59 {offsets = [4, 0], sizes = [4, 128], strides = [1, 1]} : vector<8x128xf32> to vector<4x128xf32>
    %63 = math.exp %61 : vector<4x128xf32>
    %64 = arith.mulf %63, %0 : vector<4x128xf32>
    %65 = arith.addf %64, %62 : vector<4x128xf32>
    %66 = arith.addf %34, %61 : vector<4x128xf32>
    %c2 = arith.constant 2 : index
    %c0_48 = arith.constant 0 : index
    %c0_49 = arith.constant 0 : index
    %67 = vector.load %arg3[%c2, %c0_48, %c0_49] : memref<4x32x4xf32, #tpu.memory_space<vmem>>, vector<1x32x4xf32>
    %68 = vector.shape_cast %67 : vector<1x32x4xf32> to vector<32x4xf32>
    %cst_50 = arith.constant dense<0.000000e+00> : vector<32x128xf32>
    %69 = tpu.matmul %68, %65, %cst_50 {dimension_numbers = #tpu.dot_dimension_numbers<[1], [0], [0], [1], [0, 0, 1, 1], [], []>} : vector<32x4xf32>, vector<4x128xf32>, vector<32x128xf32> -> vector<32x128xf32>
    %c2_51 = arith.constant 2 : index
    %c0_52 = arith.constant 0 : index
    %c0_53 = arith.constant 0 : index
    %70 = vector.load %arg4[%c2_51, %c0_52, %c0_53] : memref<4x32x1xf32, #tpu.memory_space<vmem>>, vector<1x32x1xf32>
    %71 = vector.shape_cast %70 : vector<1x32x1xf32> to vector<32x1xf32>
    %72 = vector.broadcast %71 : vector<32x1xf32> to vector<32x128xf32>
    %73 = arith.addf %69, %72 : vector<32x128xf32>
    %cst_54 = arith.constant 0.000000e+00 : f32
    %74 = vector.broadcast %cst_54 : f32 to vector<32x128xf32>
    %75 = arith.maximumf %73, %74 : vector<32x128xf32>
    %c2_55 = arith.constant 2 : index
    %c0_56 = arith.constant 0 : index
    %c0_57 = arith.constant 0 : index
    %76 = vector.load %arg5[%c2_55, %c0_56, %c0_57] : memref<4x32x32xf32, #tpu.memory_space<vmem>>, vector<1x32x32xf32>
    %77 = vector.shape_cast %76 : vector<1x32x32xf32> to vector<32x32xf32>
    %cst_58 = arith.constant dense<0.000000e+00> : vector<32x128xf32>
    %78 = tpu.matmul %77, %75, %cst_58 {dimension_numbers = #tpu.dot_dimension_numbers<[1], [0], [0], [1], [0, 0, 1, 1], [], []>} : vector<32x32xf32>, vector<32x128xf32>, vector<32x128xf32> -> vector<32x128xf32>
    %c2_59 = arith.constant 2 : index
    %c0_60 = arith.constant 0 : index
    %c0_61 = arith.constant 0 : index
    %79 = vector.load %arg6[%c2_59, %c0_60, %c0_61] : memref<4x32x1xf32, #tpu.memory_space<vmem>>, vector<1x32x1xf32>
    %80 = vector.shape_cast %79 : vector<1x32x1xf32> to vector<32x1xf32>
    %81 = vector.broadcast %80 : vector<32x1xf32> to vector<32x128xf32>
    %82 = arith.addf %78, %81 : vector<32x128xf32>
    %cst_62 = arith.constant 0.000000e+00 : f32
    %83 = vector.broadcast %cst_62 : f32 to vector<32x128xf32>
    %84 = arith.maximumf %82, %83 : vector<32x128xf32>
    %c2_63 = arith.constant 2 : index
    %c0_64 = arith.constant 0 : index
    %c0_65 = arith.constant 0 : index
    %85 = vector.load %arg7[%c2_63, %c0_64, %c0_65] : memref<4x8x32xf32, #tpu.memory_space<vmem>>, vector<1x8x32xf32>
    %86 = vector.shape_cast %85 : vector<1x8x32xf32> to vector<8x32xf32>
    %cst_66 = arith.constant dense<0.000000e+00> : vector<8x128xf32>
    %87 = tpu.matmul %86, %84, %cst_66 {dimension_numbers = #tpu.dot_dimension_numbers<[1], [0], [0], [1], [0, 0, 1, 1], [], []>} : vector<8x32xf32>, vector<32x128xf32>, vector<8x128xf32> -> vector<8x128xf32>
    %c2_67 = arith.constant 2 : index
    %c0_68 = arith.constant 0 : index
    %c0_69 = arith.constant 0 : index
    %88 = vector.load %arg8[%c2_67, %c0_68, %c0_69] : memref<4x8x1xf32, #tpu.memory_space<vmem>>, vector<1x8x1xf32>
    %89 = vector.shape_cast %88 : vector<1x8x1xf32> to vector<8x1xf32>
    %90 = vector.broadcast %89 : vector<8x1xf32> to vector<8x128xf32>
    %91 = arith.addf %87, %90 : vector<8x128xf32>
    %92 = vector.extract_strided_slice %91 {offsets = [0, 0], sizes = [4, 128], strides = [1, 1]} : vector<8x128xf32> to vector<4x128xf32>
    %93 = math.tanh %92 : vector<4x128xf32>
    %94 = vector.extract_strided_slice %91 {offsets = [4, 0], sizes = [4, 128], strides = [1, 1]} : vector<8x128xf32> to vector<4x128xf32>
    %95 = math.exp %93 : vector<4x128xf32>
    %96 = arith.mulf %95, %33 : vector<4x128xf32>
    %97 = arith.addf %96, %94 : vector<4x128xf32>
    %98 = arith.addf %66, %93 : vector<4x128xf32>
    %c3 = arith.constant 3 : index
    %c0_70 = arith.constant 0 : index
    %c0_71 = arith.constant 0 : index
    %99 = vector.load %arg3[%c3, %c0_70, %c0_71] : memref<4x32x4xf32, #tpu.memory_space<vmem>>, vector<1x32x4xf32>
    %100 = vector.shape_cast %99 : vector<1x32x4xf32> to vector<32x4xf32>
    %cst_72 = arith.constant dense<0.000000e+00> : vector<32x128xf32>
    %101 = tpu.matmul %100, %97, %cst_72 {dimension_numbers = #tpu.dot_dimension_numbers<[1], [0], [0], [1], [0, 0, 1, 1], [], []>} : vector<32x4xf32>, vector<4x128xf32>, vector<32x128xf32> -> vector<32x128xf32>
    %c3_73 = arith.constant 3 : index
    %c0_74 = arith.constant 0 : index
    %c0_75 = arith.constant 0 : index
    %102 = vector.load %arg4[%c3_73, %c0_74, %c0_75] : memref<4x32x1xf32, #tpu.memory_space<vmem>>, vector<1x32x1xf32>
    %103 = vector.shape_cast %102 : vector<1x32x1xf32> to vector<32x1xf32>
    %104 = vector.broadcast %103 : vector<32x1xf32> to vector<32x128xf32>
    %105 = arith.addf %101, %104 : vector<32x128xf32>
    %cst_76 = arith.constant 0.000000e+00 : f32
    %106 = vector.broadcast %cst_76 : f32 to vector<32x128xf32>
    %107 = arith.maximumf %105, %106 : vector<32x128xf32>
    %c3_77 = arith.constant 3 : index
    %c0_78 = arith.constant 0 : index
    %c0_79 = arith.constant 0 : index
    %108 = vector.load %arg5[%c3_77, %c0_78, %c0_79] : memref<4x32x32xf32, #tpu.memory_space<vmem>>, vector<1x32x32xf32>
    %109 = vector.shape_cast %108 : vector<1x32x32xf32> to vector<32x32xf32>
    %cst_80 = arith.constant dense<0.000000e+00> : vector<32x128xf32>
    %110 = tpu.matmul %109, %107, %cst_80 {dimension_numbers = #tpu.dot_dimension_numbers<[1], [0], [0], [1], [0, 0, 1, 1], [], []>} : vector<32x32xf32>, vector<32x128xf32>, vector<32x128xf32> -> vector<32x128xf32>
    %c3_81 = arith.constant 3 : index
    %c0_82 = arith.constant 0 : index
    %c0_83 = arith.constant 0 : index
    %111 = vector.load %arg6[%c3_81, %c0_82, %c0_83] : memref<4x32x1xf32, #tpu.memory_space<vmem>>, vector<1x32x1xf32>
    %112 = vector.shape_cast %111 : vector<1x32x1xf32> to vector<32x1xf32>
    %113 = vector.broadcast %112 : vector<32x1xf32> to vector<32x128xf32>
    %114 = arith.addf %110, %113 : vector<32x128xf32>
    %cst_84 = arith.constant 0.000000e+00 : f32
    %115 = vector.broadcast %cst_84 : f32 to vector<32x128xf32>
    %116 = arith.maximumf %114, %115 : vector<32x128xf32>
    %c3_85 = arith.constant 3 : index
    %c0_86 = arith.constant 0 : index
    %c0_87 = arith.constant 0 : index
    %117 = vector.load %arg7[%c3_85, %c0_86, %c0_87] : memref<4x8x32xf32, #tpu.memory_space<vmem>>, vector<1x8x32xf32>
    %118 = vector.shape_cast %117 : vector<1x8x32xf32> to vector<8x32xf32>
    %cst_88 = arith.constant dense<0.000000e+00> : vector<8x128xf32>
    %119 = tpu.matmul %118, %116, %cst_88 {dimension_numbers = #tpu.dot_dimension_numbers<[1], [0], [0], [1], [0, 0, 1, 1], [], []>} : vector<8x32xf32>, vector<32x128xf32>, vector<8x128xf32> -> vector<8x128xf32>
    %c3_89 = arith.constant 3 : index
    %c0_90 = arith.constant 0 : index
    %c0_91 = arith.constant 0 : index
    %120 = vector.load %arg8[%c3_89, %c0_90, %c0_91] : memref<4x8x1xf32, #tpu.memory_space<vmem>>, vector<1x8x1xf32>
    %121 = vector.shape_cast %120 : vector<1x8x1xf32> to vector<8x1xf32>
    %122 = vector.broadcast %121 : vector<8x1xf32> to vector<8x128xf32>
    %123 = arith.addf %119, %122 : vector<8x128xf32>
    %124 = vector.extract_strided_slice %123 {offsets = [0, 0], sizes = [4, 128], strides = [1, 1]} : vector<8x128xf32> to vector<4x128xf32>
    %125 = math.tanh %124 : vector<4x128xf32>
    %126 = vector.extract_strided_slice %123 {offsets = [4, 0], sizes = [4, 128], strides = [1, 1]} : vector<8x128xf32> to vector<4x128xf32>
    %127 = math.exp %125 : vector<4x128xf32>
    %128 = arith.mulf %127, %65 : vector<4x128xf32>
    %129 = arith.addf %128, %126 : vector<4x128xf32>
    %130 = arith.addf %98, %125 : vector<4x128xf32>
    %c0_92 = arith.constant 0 : index
    %c0_93 = arith.constant 0 : index
    %131 = vector.load %arg9[%c0_92, %c0_93] : memref<4x128xf32, #tpu.memory_space<vmem>>, vector<4x128xf32>
    tpu.vector_store %arg9[%c0_92, %c0_93], %129 {strides = array<i32>} : memref<4x128xf32, #tpu.memory_space<vmem>>, vector<4x128xf32>,
    %c0_94 = arith.constant 0 : index
    %c0_95 = arith.constant 0 : index
    %132 = vector.load %arg10[%c0_94, %c0_95] : memref<4x128xf32, #tpu.memory_space<vmem>>, vector<4x128xf32>
    tpu.vector_store %arg10[%c0_94, %c0_95], %97 {strides = array<i32>} : memref<4x128xf32, #tpu.memory_space<vmem>>, vector<4x128xf32>,
    %c0_96 = arith.constant 0 : index
    %c0_97 = arith.constant 0 : index
    %133 = vector.load %arg11[%c0_96, %c0_97] : memref<4x128xf32, #tpu.memory_space<vmem>>, vector<4x128xf32>
    tpu.vector_store %arg11[%c0_96, %c0_97], %130 {strides = array<i32>} : memref<4x128xf32, #tpu.memory_space<vmem>>, vector<4x128xf32>,
    return
  }
  func.func @transform_0(%arg0: i32) -> (i32, i32) {
    %c0_i32 = arith.constant 0 : i32
    %c0_i32_0 = arith.constant 0 : i32
    return %c0_i32, %arg0 : i32, i32
  }
  func.func @transform_1(%arg0: i32) -> (i32, i32) {
    %c0_i32 = arith.constant 0 : i32
    %c0_i32_0 = arith.constant 0 : i32
    return %c0_i32, %arg0 : i32, i32
  }
  func.func @transform_2(%arg0: i32) -> (i32, i32, i32) {
    %c0_i32 = arith.constant 0 : i32
    %c0_i32_0 = arith.constant 0 : i32
    %c0_i32_1 = arith.constant 0 : i32
    %c0_i32_2 = arith.constant 0 : i32
    return %c0_i32, %c0_i32_0, %c0_i32_1 : i32, i32, i32
  }
  func.func @transform_3(%arg0: i32) -> (i32, i32, i32) {
    %c0_i32 = arith.constant 0 : i32
    %c0_i32_0 = arith.constant 0 : i32
    %c0_i32_1 = arith.constant 0 : i32
    %c0_i32_2 = arith.constant 0 : i32
    return %c0_i32, %c0_i32_0, %c0_i32_1 : i32, i32, i32
  }
  func.func @transform_4(%arg0: i32) -> (i32, i32, i32) {
    %c0_i32 = arith.constant 0 : i32
    %c0_i32_0 = arith.constant 0 : i32
    %c0_i32_1 = arith.constant 0 : i32
    %c0_i32_2 = arith.constant 0 : i32
    return %c0_i32, %c0_i32_0, %c0_i32_1 : i32, i32, i32
  }
  func.func @transform_5(%arg0: i32) -> (i32, i32, i32) {
    %c0_i32 = arith.constant 0 : i32
    %c0_i32_0 = arith.constant 0 : i32
    %c0_i32_1 = arith.constant 0 : i32
    %c0_i32_2 = arith.constant 0 : i32
    return %c0_i32, %c0_i32_0, %c0_i32_1 : i32, i32, i32
  }
  func.func @transform_6(%arg0: i32) -> (i32, i32, i32) {
    %c0_i32 = arith.constant 0 : i32
    %c0_i32_0 = arith.constant 0 : i32
    %c0_i32_1 = arith.constant 0 : i32
    %c0_i32_2 = arith.constant 0 : i32
    return %c0_i32, %c0_i32_0, %c0_i32_1 : i32, i32, i32
  }
  func.func @transform_7(%arg0: i32) -> (i32, i32, i32) {
    %c0_i32 = arith.constant 0 : i32
    %c0_i32_0 = arith.constant 0 : i32
    %c0_i32_1 = arith.constant 0 : i32
    %c0_i32_2 = arith.constant 0 : i32
    return %c0_i32, %c0_i32_0, %c0_i32_1 : i32, i32, i32
  }
  func.func @transform_8(%arg0: i32) -> (i32, i32) {
    %c0_i32 = arith.constant 0 : i32
    %c0_i32_0 = arith.constant 0 : i32
    return %c0_i32, %arg0 : i32, i32
  }
  func.func @transform_9(%arg0: i32) -> (i32, i32) {
    %c0_i32 = arith.constant 0 : i32
    %c0_i32_0 = arith.constant 0 : i32
    return %c0_i32, %arg0 : i32, i32
  }
  func.func @transform_10(%arg0: i32) -> (i32, i32) {
    %c0_i32 = arith.constant 0 : i32
    %c0_i32_0 = arith.constant 0 : i32
    return %c0_i32, %arg0 : i32, i32
  }
}

</mosaic_0001>

<llo_original>
// kernel: tpu_custom_call.1
$region0: #{tpu_custom_call.1}
  #allocation0 [shape = 'u32[]', space=smem, size = 0x4, offset = 0x4, fixed_abs, tag = 'smem constant byte address 0x4 - core index']
  #allocation1 [shape = 'u32[144,128]{1,0:T(1,128)}', space=vmem, size = 0x12000, scoped, tag = 'internal scratch']
  %s0 = inlined_call_operand.vmem [shape: f32[4,128], index: 0, kind: input, shape index: {}]
  %s1 = inlined_call_operand.vmem [shape: f32[4,128], index: 1, kind: input, shape index: {}]
  %s2 = inlined_call_operand.vmem [shape: f32[4,32,4], index: 2, kind: input, shape index: {}]
  %s3 = inlined_call_operand.vmem [shape: f32[4,32,1], index: 3, kind: input, shape index: {}]
  %s4 = inlined_call_operand.vmem [shape: f32[4,32,32], index: 4, kind: input, shape index: {}]
  %s5 = inlined_call_operand.vmem [shape: f32[4,32,1], index: 5, kind: input, shape index: {}]
  %s6 = inlined_call_operand.vmem [shape: f32[4,8,32], index: 6, kind: input, shape index: {}]
  %s7 = inlined_call_operand.vmem [shape: f32[4,8,1], index: 7, kind: input, shape index: {}]
  %s8 = inlined_call_operand.hbm [shape: f32[4,128], index: 8, kind: output, shape index: {0}]
  %s9 = inlined_call_operand.hbm [shape: f32[4,128], index: 9, kind: output, shape index: {1}]
  %s10 = inlined_call_operand.hbm [shape: f32[4,128], index: 10, kind: output, shape index: {2}]
  %11 = xla_tuple %s8, %s9, %s10
  %s12 = sld [smem:[#allocation0]]
  $region58: #{tpu_custom_call.1} parent=0
    _
  %s14 = ssub.s32 1, %s12
  %s15 = scalar_select 0, %s14, %s12
  $region1: #{tpu_custom_call.1} parent=0
    #allocation2 [shape = 'u8[2048]{0}', space=vmem, size = 0x800, scoped, tag = 'output window, operand 0, single buffered']
    #allocation3 [shape = 's32[1]{0}', space=sflag, size = 0x4, scoped, tag = 'scoped memory for tpu_custom_call.1']
    #allocation4 [shape = 'u8[2048]{0}', space=vmem, size = 0x800, scoped, tag = 'output window, operand 1, single buffered']
    #allocation5 [shape = 's32[1]{0}', space=sflag, size = 0x4, scoped, tag = 'scoped memory for tpu_custom_call.1']
    #allocation6 [shape = 'u8[2048]{0}', space=vmem, size = 0x800, scoped, tag = 'output window, operand 2, single buffered']
    %16 = vsyncpa [#allocation3], 0
    %17 = vsyncpa [#allocation5], 0
    // Predicated region
    $region2: #{tpu_custom_call.1} parent=1 // pred_check
      _
    $region3: #{tpu_custom_call.1} parent=1 // pred_check_branch
      %19 = sbr.rel (0) target = $region5
    $region4: #{tpu_custom_call.1} parent=1 // pred_region
      _
    $region5: #{tpu_custom_call.1} parent=1 // pred_fallthru
      _
    // Predicated region
    $region6: #{tpu_custom_call.1} parent=1 // pred_check
      _
    $region7: #{tpu_custom_call.1} parent=1 // pred_check_branch
      %21 = sbr.rel (0) target = $region9
    $region8: #{tpu_custom_call.1} parent=1 // pred_region
      _
    $region9: #{tpu_custom_call.1} parent=1 // pred_fallthru
      _
    // Predicated region
    $region10: #{tpu_custom_call.1} parent=1 // pred_check
      _
    $region11: #{tpu_custom_call.1} parent=1 // pred_check_branch
      %23 = sbr.rel (0) target = $region13
    $region12: #{tpu_custom_call.1} parent=1 // pred_region
      _
    $region13: #{tpu_custom_call.1} parent=1 // pred_fallthru
      _
    // Predicated region
    $region14: #{tpu_custom_call.1} parent=1 // pred_check
      _
    $region15: #{tpu_custom_call.1} parent=1 // pred_check_branch
      %25 = sbr.rel (0) target = $region17
    $region16: #{tpu_custom_call.1} parent=1 // pred_region
      _
    $region17: #{tpu_custom_call.1} parent=1 // pred_fallthru
      _
    // Predicated region
    $region18: #{tpu_custom_call.1} parent=1 // pred_check
      _
    $region19: #{tpu_custom_call.1} parent=1 // pred_check_branch
      %27 = sbr.rel (0) target = $region21
    $region20: #{tpu_custom_call.1} parent=1 // pred_region
      _
    $region21: #{tpu_custom_call.1} parent=1 // pred_fallthru
      _
    // Predicated region
    $region22: #{tpu_custom_call.1} parent=1 // pred_check
      _
    $region23: #{tpu_custom_call.1} parent=1 // pred_check_branch
      %29 = sbr.rel (0) target = $region25
    $region24: #{tpu_custom_call.1} parent=1 // pred_region
      _
    $region25: #{tpu_custom_call.1} parent=1 // pred_fallthru
      _
    // Predicated region
    $region26: #{tpu_custom_call.1} parent=1 // pred_check
      _
    $region27: #{tpu_custom_call.1} parent=1 // pred_check_branch
      %31 = sbr.rel (0) target = $region29
    $region28: #{tpu_custom_call.1} parent=1 // pred_region
      _
    $region29: #{tpu_custom_call.1} parent=1 // pred_fallthru
      _
    // Predicated region
    $region30: #{tpu_custom_call.1} parent=1 // pred_check
      _
    $region31: #{tpu_custom_call.1} parent=1 // pred_check_branch
      %33 = sbr.rel (0) target = $region33
    $region32: #{tpu_custom_call.1} parent=1 // pred_region
      _
    $region33: #{tpu_custom_call.1} parent=1 // pred_fallthru
      _
    %v34 = vld [vmem:[%s0] sm:$0xf]
    %v35 = vld [vmem:[%s1] sm:$0xf]
    %v36 = vld [vmem:[%s2] sm:$0xff]
    %v37 = vld [vmem:[%s2 + $0x8] sm:$0xff]
    %v38 = vld [vmem:[%s2 + $0x10] sm:$0xff]
    %v39 = vld [vmem:[%s2 + $0x18] sm:$0xff]
    %v40 = vld [vmem:[%s3] sm:$0xff]
    %v41 = vld [vmem:[%s3 + $0x8] sm:$0xff]
    %v42 = vld [vmem:[%s3 + $0x10] sm:$0xff]
    %v43 = vld [vmem:[%s3 + $0x18] sm:$0xff]
    %45 = vset.pattern.permute.xlu0 0
    %46 = vperm.xlu0 %45, %v40
    %v47 = vpop.permute.xlu0 %46
    %50 = vset.pattern.permute.xlu0 0
    %51 = vperm.xlu0 %50, %v41
    %v52 = vpop.permute.xlu0 %51
    %55 = vset.pattern.permute.xlu0 0
    %56 = vperm.xlu0 %55, %v42
    %v57 = vpop.permute.xlu0 %56
    %60 = vset.pattern.permute.xlu0 0
    %61 = vperm.xlu0 %60, %v43
    %v62 = vpop.permute.xlu0 %61
    %vm64 = vcmask 31744
    %v66 = vsel %vm64, %v36, 0
    %v69 = vsel %vm64, %v37, 0
    %v72 = vsel %vm64, %v38, 0
    %v75 = vsel %vm64, %v39, 0
    %vm77 = vcmask 1043456
    %v79 = vsel %vm77, %v34, 0
    %81 = vmatprep.subr.mxu0 0.0
    %82 = vmatpush1.msra.mxu0 %v79
    %83 = vmatprep.subr.mxu0 0.0
    %84 = vmatpush1.msra.mxu0 0.0
    %85 = vmatprep.subr.mxu0 0.0
    %86 = vmatpush1.msra.mxu0 0.0
    %87 = vmatprep.subr.mxu0 0.0
    %88 = vmatpush1.msra.mxu0 0.0
    %89 = vmatprep.subr.mxu0 0.0
    %90 = vmatpush1.msra.mxu0 0.0
    %91 = vmatprep.subr.mxu0 0.0
    %92 = vmatpush1.msra.mxu0 0.0
    %93 = vmatprep.subr.mxu0 0.0
    %94 = vmatpush1.msra.mxu0 0.0
    %95 = vmatprep.subr.mxu0 0.0
    %96 = vmatpush1.msra.mxu0 0.0
    %97 = vmatprep.subr.mxu0 0.0
    %98 = vmatpush1.msra.mxu0 0.0
    %99 = vmatprep.subr.mxu0 0.0
    %100 = vmatpush1.msra.mxu0 0.0
    %101 = vmatprep.subr.mxu0 0.0
    %102 = vmatpush1.msra.mxu0 0.0
    %103 = vmatprep.subr.mxu0 0.0
    %104 = vmatpush1.msra.mxu0 0.0
    %105 = vmatprep.subr.mxu0 0.0
    %106 = vmatpush1.msra.mxu0 0.0
    %107 = vmatprep.subr.mxu0 0.0
    %108 = vmatpush1.msra.mxu0 0.0
    %109 = vmatprep.subr.mxu0 0.0
    %110 = vmatpush1.msra.mxu0 0.0
    %111 = vmatprep.subr.mxu0 0.0
    %112 = vmatpush1.msra.mxu0 0.0
    %113 = vmatprep.subr.mxu0 0.0
    %114 = vmatpush1.msra.mxu0 0.0
    %115 = vmatprep.subr.mxu0 0.0
    %116 = vmatpush1.msra.mxu0 0.0
    %117 = vmatprep.subr.mxu0 0.0
    %118 = vmatpush1.msra.mxu0 0.0
    %119 = vmatprep.subr.mxu0 0.0
    %120 = vmatpush1.msra.mxu0 0.0
    %121 = vmatprep.subr.mxu0 0.0
    %122 = vmatpush1.msra.mxu0 0.0
    %123 = vmatprep.subr.mxu0 0.0
    %124 = vmatpush1.msra.mxu0 0.0
    %125 = vmatprep.subr.mxu0 0.0
    %126 = vmatpush1.msra.mxu0 0.0
    %127 = vmatprep.subr.mxu0 0.0
    %128 = vmatpush1.msra.mxu0 0.0
    %129 = vmatprep.subr.mxu0 0.0
    %130 = vmatpush1.msra.mxu0 0.0
    %131 = vmatprep.subr.mxu0 0.0
    %132 = vmatpush1.msra.mxu0 0.0
    %133 = vmatprep.subr.mxu0 0.0
    %134 = vmatpush1.msra.mxu0 0.0
    %135 = vmatprep.subr.mxu0 0.0
    %136 = vmatpush1.msra.mxu0 0.0
    %137 = vmatprep.subr.mxu0 0.0
    %138 = vmatpush1.msra.mxu0 0.0
    %139 = vmatprep.subr.mxu0 0.0
    %140 = vmatpush1.msra.mxu0 0.0
    %141 = vmatprep.subr.mxu0 0.0
    %142 = vmatpush1.msra.mxu0 0.0
    %143 = vmatprep.subr.mxu0 0.0
    %144 = vmatpush1.msra.mxu0 0.0
    %145 = vmatprep.mubr.f32.mxu0 0.0
    %146 = vmatmul.mubr.f32.gmra.mrb[0].mxu0 %v66
    %v147 = vpop.f32.mrb[0].mxu0
    %v148 = vadd.f32 %v47, %v147
    %v149 = vpop.f32.mrb[0].mxu0
    %150 = vmatprep.mubr.f32.mxu0 0.0
    %151 = vmatmul.mubr.f32.gmra.mrb[0].mxu0 %v69
    %v152 = vpop.f32.mrb[0].mxu0
    %v153 = vadd.f32 %v52, %v152
    %v154 = vpop.f32.mrb[0].mxu0
    %155 = vmatprep.mubr.f32.mxu0 0.0
    %156 = vmatmul.mubr.f32.gmra.mrb[0].mxu0 %v72
    %v157 = vpop.f32.mrb[0].mxu0
    %v158 = vadd.f32 %v57, %v157
    %v159 = vpop.f32.mrb[0].mxu0
    %160 = vmatprep.mubr.f32.mxu0 0.0
    %161 = vmatmul.mubr.f32.gmra.mrb[0].mxu0 %v75
    %v162 = vpop.f32.mrb[0].mxu0
    %v163 = vadd.f32 %v62, %v162
    %v164 = vpop.f32.mrb[0].mxu0
    %165 = vdwg.mxu0
    %v166 = vmax.f32 %v148, 0.0
    %v167 = vmax.f32 %v153, 0.0
    %v168 = vmax.f32 %v158, 0.0
    %v169 = vmax.f32 %v163, 0.0
    %v170 = vld [vmem:[%s4] sm:$0xff]
    %v171 = vld [vmem:[%s4 + $0x8] sm:$0xff]
    %v172 = vld [vmem:[%s4 + $0x10] sm:$0xff]
    %v173 = vld [vmem:[%s4 + $0x18] sm:$0xff]
    %v174 = vld [vmem:[%s5] sm:$0xff]
    %v175 = vld [vmem:[%s5 + $0x8] sm:$0xff]
    %v176 = vld [vmem:[%s5 + $0x10] sm:$0xff]
    %v177 = vld [vmem:[%s5 + $0x18] sm:$0xff]
    %179 = vset.pattern.permute.xlu0 0
    %180 = vperm.xlu0 %179, %v174
    %v181 = vpop.permute.xlu0 %180
    %184 = vset.pattern.permute.xlu0 0
    %185 = vperm.xlu0 %184, %v175
    %v186 = vpop.permute.xlu0 %185
    %189 = vset.pattern.permute.xlu0 0
    %190 = vperm.xlu0 %189, %v176
    %v191 = vpop.permute.xlu0 %190
    %194 = vset.pattern.permute.xlu0 0
    %195 = vperm.xlu0 %194, %v177
    %v196 = vpop.permute.xlu0 %195
    %vm198 = vcmask 261120
    %v200 = vsel %vm198, %v170, 0
    %v203 = vsel %vm198, %v171, 0
    %v206 = vsel %vm198, %v172, 0
    %v209 = vsel %vm198, %v173, 0
    %211 = vmatprep.subr.mxu0 0.0
    %212 = vmatpush1.msra.mxu0 %v166
    %213 = vmatprep.subr.mxu0 0.0
    %214 = vmatpush1.msra.mxu0 %v167
    %215 = vmatprep.subr.mxu0 0.0
    %216 = vmatpush1.msra.mxu0 %v168
    %217 = vmatprep.subr.mxu0 0.0
    %218 = vmatpush1.msra.mxu0 %v169
    %219 = vmatprep.subr.mxu0 0.0
    %220 = vmatpush1.msra.mxu0 0.0
    %221 = vmatprep.subr.mxu0 0.0
    %222 = vmatpush1.msra.mxu0 0.0
    %223 = vmatprep.subr.mxu0 0.0
    %224 = vmatpush1.msra.mxu0 0.0
    %225 = vmatprep.subr.mxu0 0.0
    %226 = vmatpush1.msra.mxu0 0.0
    %227 = vmatprep.subr.mxu0 0.0
    %228 = vmatpush1.msra.mxu0 0.0
    %229 = vmatprep.subr.mxu0 0.0
    %230 = vmatpush1.msra.mxu0 0.0
    %231 = vmatprep.subr.mxu0 0.0
    %232 = vmatpush1.msra.mxu0 0.0
    %233 = vmatprep.subr.mxu0 0.0
    %234 = vmatpush1.msra.mxu0 0.0
    %235 = vmatprep.subr.mxu0 0.0
    %236 = vmatpush1.msra.mxu0 0.0
    %237 = vmatprep.subr.mxu0 0.0
    %238 = vmatpush1.msra.mxu0 0.0
    %239 = vmatprep.subr.mxu0 0.0
    %240 = vmatpush1.msra.mxu0 0.0
    %241 = vmatprep.subr.mxu0 0.0
    %242 = vmatpush1.msra.mxu0 0.0
    %243 = vmatprep.subr.mxu0 0.0
    %244 = vmatpush1.msra.mxu0 0.0
    %245 = vmatprep.subr.mxu0 0.0
    %246 = vmatpush1.msra.mxu0 0.0
    %247 = vmatprep.subr.mxu0 0.0
    %248 = vmatpush1.msra.mxu0 0.0
    %249 = vmatprep.subr.mxu0 0.0
    %250 = vmatpush1.msra.mxu0 0.0
    %251 = vmatprep.subr.mxu0 0.0
    %252 = vmatpush1.msra.mxu0 0.0
    %253 = vmatprep.subr.mxu0 0.0
    %254 = vmatpush1.msra.mxu0 0.0
    %255 = vmatprep.subr.mxu0 0.0
    %256 = vmatpush1.msra.mxu0 0.0
    %257 = vmatprep.subr.mxu0 0.0
    %258 = vmatpush1.msra.mxu0 0.0
    %259 = vmatprep.subr.mxu0 0.0
    %260 = vmatpush1.msra.mxu0 0.0
    %261 = vmatprep.subr.mxu0 0.0
    %262 = vmatpush1.msra.mxu0 0.0
    %263 = vmatprep.subr.mxu0 0.0
    %264 = vmatpush1.msra.mxu0 0.0
    %265 = vmatprep.subr.mxu0 0.0
    %266 = vmatpush1.msra.mxu0 0.0
    %267 = vmatprep.subr.mxu0 0.0
    %268 = vmatpush1.msra.mxu0 0.0
    %269 = vmatprep.subr.mxu0 0.0
    %270 = vmatpush1.msra.mxu0 0.0
    %271 = vmatprep.subr.mxu0 0.0
    %272 = vmatpush1.msra.mxu0 0.0
    %273 = vmatprep.subr.mxu0 0.0
    %274 = vmatpush1.msra.mxu0 0.0
    %275 = vmatprep.mubr.f32.mxu0 0.0
    %276 = vmatmul.mubr.f32.gmra.mrb[0].mxu0 %v200
    %v277 = vpop.f32.mrb[0].mxu0
    %v278 = vadd.f32 %v181, %v277
    %v279 = vpop.f32.mrb[0].mxu0
    %280 = vmatprep.mubr.f32.mxu0 0.0
    %281 = vmatmul.mubr.f32.gmra.mrb[0].mxu0 %v203
    %v282 = vpop.f32.mrb[0].mxu0
    %v283 = vadd.f32 %v186, %v282
    %v284 = vpop.f32.mrb[0].mxu0
    %285 = vmatprep.mubr.f32.mxu0 0.0
    %286 = vmatmul.mubr.f32.gmra.mrb[0].mxu0 %v206
    %v287 = vpop.f32.mrb[0].mxu0
    %v288 = vadd.f32 %v191, %v287
    %v289 = vpop.f32.mrb[0].mxu0
    %290 = vmatprep.mubr.f32.mxu0 0.0
    %291 = vmatmul.mubr.f32.gmra.mrb[0].mxu0 %v209
    %v292 = vpop.f32.mrb[0].mxu0
    %v293 = vadd.f32 %v196, %v292
    %v294 = vpop.f32.mrb[0].mxu0
    %295 = vdwg.mxu0
    %v296 = vmax.f32 %v278, 0.0
    %v297 = vmax.f32 %v283, 0.0
    %v298 = vmax.f32 %v288, 0.0
    %v299 = vmax.f32 %v293, 0.0
    %v300 = vld [vmem:[%s6] sm:$0xff]
    %v301 = vld [vmem:[%s7] sm:$0xff]
    %303 = vset.pattern.permute.xlu0 0
    %304 = vperm.xlu0 %303, %v301
    %v305 = vpop.permute.xlu0 %304
    %v308 = vsel %vm198, %v300, 0
    %310 = vmatprep.subr.mxu0 0.0
    %311 = vmatpush1.msra.mxu0 %v296
    %312 = vmatprep.subr.mxu0 0.0
    %313 = vmatpush1.msra.mxu0 %v297
    %314 = vmatprep.subr.mxu0 0.0
    %315 = vmatpush1.msra.mxu0 %v298
    %316 = vmatprep.subr.mxu0 0.0
    %317 = vmatpush1.msra.mxu0 %v299
    %318 = vmatprep.subr.mxu0 0.0
    %319 = vmatpush1.msra.mxu0 0.0
    %320 = vmatprep.subr.mxu0 0.0
    %321 = vmatpush1.msra.mxu0 0.0
    %322 = vmatprep.subr.mxu0 0.0
    %323 = vmatpush1.msra.mxu0 0.0
    %324 = vmatprep.subr.mxu0 0.0
    %325 = vmatpush1.msra.mxu0 0.0
    %326 = vmatprep.subr.mxu0 0.0
    %327 = vmatpush1.msra.mxu0 0.0
    %328 = vmatprep.subr.mxu0 0.0
    %329 = vmatpush1.msra.mxu0 0.0
    %330 = vmatprep.subr.mxu0 0.0
    %331 = vmatpush1.msra.mxu0 0.0
    %332 = vmatprep.subr.mxu0 0.0
    %333 = vmatpush1.msra.mxu0 0.0
    %334 = vmatprep.subr.mxu0 0.0
    %335 = vmatpush1.msra.mxu0 0.0
    %336 = vmatprep.subr.mxu0 0.0
    %337 = vmatpush1.msra.mxu0 0.0
    %338 = vmatprep.subr.mxu0 0.0
    %339 = vmatpush1.msra.mxu0 0.0
    %340 = vmatprep.subr.mxu0 0.0
    %341 = vmatpush1.msra.mxu0 0.0
    %342 = vmatprep.subr.mxu0 0.0
    %343 = vmatpush1.msra.mxu0 0.0
    %344 = vmatprep.subr.mxu0 0.0
    %345 = vmatpush1.msra.mxu0 0.0
    %346 = vmatprep.subr.mxu0 0.0
    %347 = vmatpush1.msra.mxu0 0.0
    %348 = vmatprep.subr.mxu0 0.0
    %349 = vmatpush1.msra.mxu0 0.0
    %350 = vmatprep.subr.mxu0 0.0
    %351 = vmatpush1.msra.mxu0 0.0
    %352 = vmatprep.subr.mxu0 0.0
    %353 = vmatpush1.msra.mxu0 0.0
    %354 = vmatprep.subr.mxu0 0.0
    %355 = vmatpush1.msra.mxu0 0.0
    %356 = vmatprep.subr.mxu0 0.0
    %357 = vmatpush1.msra.mxu0 0.0
    %358 = vmatprep.subr.mxu0 0.0
    %359 = vmatpush1.msra.mxu0 0.0
    %360 = vmatprep.subr.mxu0 0.0
    %361 = vmatpush1.msra.mxu0 0.0
    %362 = vmatprep.subr.mxu0 0.0
    %363 = vmatpush1.msra.mxu0 0.0
    %364 = vmatprep.subr.mxu0 0.0
    %365 = vmatpush1.msra.mxu0 0.0
    %366 = vmatprep.subr.mxu0 0.0
    %367 = vmatpush1.msra.mxu0 0.0
    %368 = vmatprep.subr.mxu0 0.0
    %369 = vmatpush1.msra.mxu0 0.0
    %370 = vmatprep.subr.mxu0 0.0
    %371 = vmatpush1.msra.mxu0 0.0
    %372 = vmatprep.subr.mxu0 0.0
    %373 = vmatpush1.msra.mxu0 0.0
    %374 = vmatprep.mubr.f32.mxu0 0.0
    %375 = vmatmul.mubr.f32.gmra.mrb[0].mxu0 %v308
    %v376 = vpop.f32.mrb[0].mxu0
    %v377 = vadd.f32 %v305, %v376
    %v378 = vpop.f32.mrb[0].mxu0
    %379 = vdwg.mxu0
    %v380 = vtanh.pop %v377
    %v381 = vmul.f32 %v380, 1.442695
    %v382 = vpow.pop %v381
    %v383 = vmul.f32 %v382, %v35
    %v385 = vrot.slane %v377, 4
    %v387 = vadd.f32 %v383, %v385
    %v388 = vadd.f32 %v380, 0.0
    %s389 = scalar_lea.vmem %s2, 32
    %v390 = vld [vmem:[%s389] sm:$0xff]
    %v391 = vld [vmem:[%s389 + $0x8] sm:$0xff]
    %v392 = vld [vmem:[%s389 + $0x10] sm:$0xff]
    %v393 = vld [vmem:[%s389 + $0x18] sm:$0xff]
    %s394 = scalar_lea.vmem %s3, 32
    %v395 = vld [vmem:[%s394] sm:$0xff]
    %v396 = vld [vmem:[%s394 + $0x8] sm:$0xff]
    %v397 = vld [vmem:[%s394 + $0x10] sm:$0xff]
    %v398 = vld [vmem:[%s394 + $0x18] sm:$0xff]
    %400 = vset.pattern.permute.xlu0 0
    %401 = vperm.xlu0 %400, %v395
    %v402 = vpop.permute.xlu0 %401
    %405 = vset.pattern.permute.xlu0 0
    %406 = vperm.xlu0 %405, %v396
    %v407 = vpop.permute.xlu0 %406
    %410 = vset.pattern.permute.xlu0 0
    %411 = vperm.xlu0 %410, %v397
    %v412 = vpop.permute.xlu0 %411
    %415 = vset.pattern.permute.xlu0 0
    %416 = vperm.xlu0 %415, %v398
    %v417 = vpop.permute.xlu0 %416
    %v420 = vsel %vm64, %v390, 0
    %v423 = vsel %vm64, %v391, 0
    %v426 = vsel %vm64, %v392, 0
    %v429 = vsel %vm64, %v393, 0
    %v432 = vsel %vm77, %v387, 0
    %434 = vmatprep.subr.mxu0 0.0
    %435 = vmatpush1.msra.mxu0 %v432
    %436 = vmatprep.subr.mxu0 0.0
    %437 = vmatpush1.msra.mxu0 0.0
    %438 = vmatprep.subr.mxu0 0.0
    %439 = vmatpush1.msra.mxu0 0.0
    %440 = vmatprep.subr.mxu0 0.0
    %441 = vmatpush1.msra.mxu0 0.0
    %442 = vmatprep.subr.mxu0 0.0
    %443 = vmatpush1.msra.mxu0 0.0
    %444 = vmatprep.subr.mxu0 0.0
    %445 = vmatpush1.msra.mxu0 0.0
    %446 = vmatprep.subr.mxu0 0.0
    %447 = vmatpush1.msra.mxu0 0.0
    %448 = vmatprep.subr.mxu0 0.0
    %449 = vmatpush1.msra.mxu0 0.0
    %450 = vmatprep.subr.mxu0 0.0
    %451 = vmatpush1.msra.mxu0 0.0
    %452 = vmatprep.subr.mxu0 0.0
    %453 = vmatpush1.msra.mxu0 0.0
    %454 = vmatprep.subr.mxu0 0.0
    %455 = vmatpush1.msra.mxu0 0.0
    %456 = vmatprep.subr.mxu0 0.0
    %457 = vmatpush1.msra.mxu0 0.0
    %458 = vmatprep.subr.mxu0 0.0
    %459 = vmatpush1.msra.mxu0 0.0
    %460 = vmatprep.subr.mxu0 0.0
    %461 = vmatpush1.msra.mxu0 0.0
    %462 = vmatprep.subr.mxu0 0.0
    %463 = vmatpush1.msra.mxu0 0.0
    %464 = vmatprep.subr.mxu0 0.0
    %465 = vmatpush1.msra.mxu0 0.0
    %466 = vmatprep.subr.mxu0 0.0
    %467 = vmatpush1.msra.mxu0 0.0
    %468 = vmatprep.subr.mxu0 0.0
    %469 = vmatpush1.msra.mxu0 0.0
    %470 = vmatprep.subr.mxu0 0.0
    %471 = vmatpush1.msra.mxu0 0.0
    %472 = vmatprep.subr.mxu0 0.0
    %473 = vmatpush1.msra.mxu0 0.0
    %474 = vmatprep.subr.mxu0 0.0
    %475 = vmatpush1.msra.mxu0 0.0
    %476 = vmatprep.subr.mxu0 0.0
    %477 = vmatpush1.msra.mxu0 0.0
    %478 = vmatprep.subr.mxu0 0.0
    %479 = vmatpush1.msra.mxu0 0.0
    %480 = vmatprep.subr.mxu0 0.0
    %481 = vmatpush1.msra.mxu0 0.0
    %482 = vmatprep.subr.mxu0 0.0
    %483 = vmatpush1.msra.mxu0 0.0
    %484 = vmatprep.subr.mxu0 0.0
    %485 = vmatpush1.msra.mxu0 0.0
    %486 = vmatprep.subr.mxu0 0.0
    %487 = vmatpush1.msra.mxu0 0.0
    %488 = vmatprep.subr.mxu0 0.0
    %489 = vmatpush1.msra.mxu0 0.0
    %490 = vmatprep.subr.mxu0 0.0
    %491 = vmatpush1.msra.mxu0 0.0
    %492 = vmatprep.subr.mxu0 0.0
    %493 = vmatpush1.msra.mxu0 0.0
    %494 = vmatprep.subr.mxu0 0.0
    %495 = vmatpush1.msra.mxu0 0.0
    %496 = vmatprep.subr.mxu0 0.0
    %497 = vmatpush1.msra.mxu0 0.0
    %498 = vmatprep.mubr.f32.mxu0 0.0
    %499 = vmatmul.mubr.f32.gmra.mrb[0].mxu0 %v420
    %v500 = vpop.f32.mrb[0].mxu0
    %v501 = vadd.f32 %v402, %v500
    %v502 = vpop.f32.mrb[0].mxu0
    %503 = vmatprep.mubr.f32.mxu0 0.0
    %504 = vmatmul.mubr.f32.gmra.mrb[0].mxu0 %v423
    %v505 = vpop.f32.mrb[0].mxu0
    %v506 = vadd.f32 %v407, %v505
    %v507 = vpop.f32.mrb[0].mxu0
    %508 = vmatprep.mubr.f32.mxu0 0.0
    %509 = vmatmul.mubr.f32.gmra.mrb[0].mxu0 %v426
    %v510 = vpop.f32.mrb[0].mxu0
    %v511 = vadd.f32 %v412, %v510
    %v512 = vpop.f32.mrb[0].mxu0
    %513 = vmatprep.mubr.f32.mxu0 0.0
    %514 = vmatmul.mubr.f32.gmra.mrb[0].mxu0 %v429
    %v515 = vpop.f32.mrb[0].mxu0
    %v516 = vadd.f32 %v417, %v515
    %v517 = vpop.f32.mrb[0].mxu0
    %518 = vdwg.mxu0
    %v519 = vmax.f32 %v501, 0.0
    %v520 = vmax.f32 %v506, 0.0
    %v521 = vmax.f32 %v511, 0.0
    %v522 = vmax.f32 %v516, 0.0
    %s523 = scalar_lea.vmem %s4, 32
    %v524 = vld [vmem:[%s523] sm:$0xff]
    %v525 = vld [vmem:[%s523 + $0x8] sm:$0xff]
    %v526 = vld [vmem:[%s523 + $0x10] sm:$0xff]
    %v527 = vld [vmem:[%s523 + $0x18] sm:$0xff]
    %s528 = scalar_lea.vmem %s5, 32
    %v529 = vld [vmem:[%s528] sm:$0xff]
    %v530 = vld [vmem:[%s528 + $0x8] sm:$0xff]
    %v531 = vld [vmem:[%s528 + $0x10] sm:$0xff]
    %v532 = vld [vmem:[%s528 + $0x18] sm:$0xff]
    %534 = vset.pattern.permute.xlu0 0
    %535 = vperm.xlu0 %534, %v529
    %v536 = vpop.permute.xlu0 %535
    %539 = vset.pattern.permute.xlu0 0
    %540 = vperm.xlu0 %539, %v530
    %v541 = vpop.permute.xlu0 %540
    %544 = vset.pattern.permute.xlu0 0
    %545 = vperm.xlu0 %544, %v531
    %v546 = vpop.permute.xlu0 %545
    %549 = vset.pattern.permute.xlu0 0
    %550 = vperm.xlu0 %549, %v532
    %v551 = vpop.permute.xlu0 %550
    %v554 = vsel %vm198, %v524, 0
    %v557 = vsel %vm198, %v525, 0
    %v560 = vsel %vm198, %v526, 0
    %v563 = vsel %vm198, %v527, 0
    %565 = vmatprep.subr.mxu0 0.0
    %566 = vmatpush1.msra.mxu0 %v519
    %567 = vmatprep.subr.mxu0 0.0
    %568 = vmatpush1.msra.mxu0 %v520
    %569 = vmatprep.subr.mxu0 0.0
    %570 = vmatpush1.msra.mxu0 %v521
    %571 = vmatprep.subr.mxu0 0.0
    %572 = vmatpush1.msra.mxu0 %v522
    %573 = vmatprep.subr.mxu0 0.0
    %574 = vmatpush1.msra.mxu0 0.0
    %575 = vmatprep.subr.mxu0 0.0
    %576 = vmatpush1.msra.mxu0 0.0
    %577 = vmatprep.subr.mxu0 0.0
    %578 = vmatpush1.msra.mxu0 0.0
    %579 = vmatprep.subr.mxu0 0.0
    %580 = vmatpush1.msra.mxu0 0.0
    %581 = vmatprep.subr.mxu0 0.0
    %582 = vmatpush1.msra.mxu0 0.0
    %583 = vmatprep.subr.mxu0 0.0
    %584 = vmatpush1.msra.mxu0 0.0
    %585 = vmatprep.subr.mxu0 0.0
    %586 = vmatpush1.msra.mxu0 0.0
    %587 = vmatprep.subr.mxu0 0.0
    %588 = vmatpush1.msra.mxu0 0.0
    %589 = vmatprep.subr.mxu0 0.0
    %590 = vmatpush1.msra.mxu0 0.0
    %591 = vmatprep.subr.mxu0 0.0
    %592 = vmatpush1.msra.mxu0 0.0
    %593 = vmatprep.subr.mxu0 0.0
    %594 = vmatpush1.msra.mxu0 0.0
    %595 = vmatprep.subr.mxu0 0.0
    %596 = vmatpush1.msra.mxu0 0.0
    %597 = vmatprep.subr.mxu0 0.0
    %598 = vmatpush1.msra.mxu0 0.0
    %599 = vmatprep.subr.mxu0 0.0
    %600 = vmatpush1.msra.mxu0 0.0
    %601 = vmatprep.subr.mxu0 0.0
    %602 = vmatpush1.msra.mxu0 0.0
    %603 = vmatprep.subr.mxu0 0.0
    %604 = vmatpush1.msra.mxu0 0.0
    %605 = vmatprep.subr.mxu0 0.0
    %606 = vmatpush1.msra.mxu0 0.0
    %607 = vmatprep.subr.mxu0 0.0
    %608 = vmatpush1.msra.mxu0 0.0
    %609 = vmatprep.subr.mxu0 0.0
    %610 = vmatpush1.msra.mxu0 0.0
    %611 = vmatprep.subr.mxu0 0.0
    %612 = vmatpush1.msra.mxu0 0.0
    %613 = vmatprep.subr.mxu0 0.0
    %614 = vmatpush1.msra.mxu0 0.0
    %615 = vmatprep.subr.mxu0 0.0
    %616 = vmatpush1.msra.mxu0 0.0
    %617 = vmatprep.subr.mxu0 0.0
    %618 = vmatpush1.msra.mxu0 0.0
    %619 = vmatprep.subr.mxu0 0.0
    %620 = vmatpush1.msra.mxu0 0.0
    %621 = vmatprep.subr.mxu0 0.0
    %622 = vmatpush1.msra.mxu0 0.0
    %623 = vmatprep.subr.mxu0 0.0
    %624 = vmatpush1.msra.mxu0 0.0
    %625 = vmatprep.subr.mxu0 0.0
    %626 = vmatpush1.msra.mxu0 0.0
    %627 = vmatprep.subr.mxu0 0.0
    %628 = vmatpush1.msra.mxu0 0.0
    %629 = vmatprep.mubr.f32.mxu0 0.0
    %630 = vmatmul.mubr.f32.gmra.mrb[0].mxu0 %v554
    %v631 = vpop.f32.mrb[0].mxu0
    %v632 = vadd.f32 %v536, %v631
    %v633 = vpop.f32.mrb[0].mxu0
    %634 = vmatprep.mubr.f32.mxu0 0.0
    %635 = vmatmul.mubr.f32.gmra.mrb[0].mxu0 %v557
    %v636 = vpop.f32.mrb[0].mxu0
    %v637 = vadd.f32 %v541, %v636
    %v638 = vpop.f32.mrb[0].mxu0
    %639 = vmatprep.mubr.f32.mxu0 0.0
    %640 = vmatmul.mubr.f32.gmra.mrb[0].mxu0 %v560
    %v641 = vpop.f32.mrb[0].mxu0
    %v642 = vadd.f32 %v546, %v641
    %v643 = vpop.f32.mrb[0].mxu0
    %644 = vmatprep.mubr.f32.mxu0 0.0
    %645 = vmatmul.mubr.f32.gmra.mrb[0].mxu0 %v563
    %v646 = vpop.f32.mrb[0].mxu0
    %v647 = vadd.f32 %v551, %v646
    %v648 = vpop.f32.mrb[0].mxu0
    %649 = vdwg.mxu0
    %v650 = vmax.f32 %v632, 0.0
    %v651 = vmax.f32 %v637, 0.0
    %v652 = vmax.f32 %v642, 0.0
    %v653 = vmax.f32 %v647, 0.0
    %s654 = scalar_lea.vmem %s6, 8
    %v655 = vld [vmem:[%s654] sm:$0xff]
    %s656 = scalar_lea.vmem %s7, 8
    %v657 = vld [vmem:[%s656] sm:$0xff]
    %659 = vset.pattern.permute.xlu0 0
    %660 = vperm.xlu0 %659, %v657
    %v661 = vpop.permute.xlu0 %660
    %v664 = vsel %vm198, %v655, 0
    %666 = vmatprep.subr.mxu0 0.0
    %667 = vmatpush1.msra.mxu0 %v650
    %668 = vmatprep.subr.mxu0 0.0
    %669 = vmatpush1.msra.mxu0 %v651
    %670 = vmatprep.subr.mxu0 0.0
    %671 = vmatpush1.msra.mxu0 %v652
    %672 = vmatprep.subr.mxu0 0.0
    %673 = vmatpush1.msra.mxu0 %v653
    %674 = vmatprep.subr.mxu0 0.0
    %675 = vmatpush1.msra.mxu0 0.0
    %676 = vmatprep.subr.mxu0 0.0
    %677 = vmatpush1.msra.mxu0 0.0
    %678 = vmatprep.subr.mxu0 0.0
    %679 = vmatpush1.msra.mxu0 0.0
    %680 = vmatprep.subr.mxu0 0.0
    %681 = vmatpush1.msra.mxu0 0.0
    %682 = vmatprep.subr.mxu0 0.0
    %683 = vmatpush1.msra.mxu0 0.0
    %684 = vmatprep.subr.mxu0 0.0
    %685 = vmatpush1.msra.mxu0 0.0
    %686 = vmatprep.subr.mxu0 0.0
    %687 = vmatpush1.msra.mxu0 0.0
    %688 = vmatprep.subr.mxu0 0.0
    %689 = vmatpush1.msra.mxu0 0.0
    %690 = vmatprep.subr.mxu0 0.0
    %691 = vmatpush1.msra.mxu0 0.0
    %692 = vmatprep.subr.mxu0 0.0
    %693 = vmatpush1.msra.mxu0 0.0
    %694 = vmatprep.subr.mxu0 0.0
    %695 = vmatpush1.msra.mxu0 0.0
    %696 = vmatprep.subr.mxu0 0.0
    %697 = vmatpush1.msra.mxu0 0.0
    %698 = vmatprep.subr.mxu0 0.0
    %699 = vmatpush1.msra.mxu0 0.0
    %700 = vmatprep.subr.mxu0 0.0
    %701 = vmatpush1.msra.mxu0 0.0
    %702 = vmatprep.subr.mxu0 0.0
    %703 = vmatpush1.msra.mxu0 0.0
    %704 = vmatprep.subr.mxu0 0.0
    %705 = vmatpush1.msra.mxu0 0.0
    %706 = vmatprep.subr.mxu0 0.0
    %707 = vmatpush1.msra.mxu0 0.0
    %708 = vmatprep.subr.mxu0 0.0
    %709 = vmatpush1.msra.mxu0 0.0
    %710 = vmatprep.subr.mxu0 0.0
    %711 = vmatpush1.msra.mxu0 0.0
    %712 = vmatprep.subr.mxu0 0.0
    %713 = vmatpush1.msra.mxu0 0.0
    %714 = vmatprep.subr.mxu0 0.0
    %715 = vmatpush1.msra.mxu0 0.0
    %716 = vmatprep.subr.mxu0 0.0
    %717 = vmatpush1.msra.mxu0 0.0
    %718 = vmatprep.subr.mxu0 0.0
    %719 = vmatpush1.msra.mxu0 0.0
    %720 = vmatprep.subr.mxu0 0.0
    %721 = vmatpush1.msra.mxu0 0.0
    %722 = vmatprep.subr.mxu0 0.0
    %723 = vmatpush1.msra.mxu0 0.0
    %724 = vmatprep.subr.mxu0 0.0
    %725 = vmatpush1.msra.mxu0 0.0
    %726 = vmatprep.subr.mxu0 0.0
    %727 = vmatpush1.msra.mxu0 0.0
    %728 = vmatprep.subr.mxu0 0.0
    %729 = vmatpush1.msra.mxu0 0.0
    %730 = vmatprep.mubr.f32.mxu0 0.0
    %731 = vmatmul.mubr.f32.gmra.mrb[0].mxu0 %v664
    %v732 = vpop.f32.mrb[0].mxu0
    %v733 = vadd.f32 %v661, %v732
    %v734 = vpop.f32.mrb[0].mxu0
    %735 = vdwg.mxu0
    %v736 = vtanh.pop %v733
    %v737 = vmul.f32 %v736, 1.442695
    %v738 = vpow.pop %v737
    %v739 = vmul.f32 %v738, %v34
    %v741 = vrot.slane %v733, 4
    %v743 = vadd.f32 %v739, %v741
    %v744 = vadd.f32 %v388, %v736
    %s745 = scalar_lea.vmem %s2, 64
    %v746 = vld [vmem:[%s745] sm:$0xff]
    %v747 = vld [vmem:[%s745 + $0x8] sm:$0xff]
    %v748 = vld [vmem:[%s745 + $0x10] sm:$0xff]
    %v749 = vld [vmem:[%s745 + $0x18] sm:$0xff]
    %s750 = scalar_lea.vmem %s3, 64
    %v751 = vld [vmem:[%s750] sm:$0xff]
    %v752 = vld [vmem:[%s750 + $0x8] sm:$0xff]
    %v753 = vld [vmem:[%s750 + $0x10] sm:$0xff]
    %v754 = vld [vmem:[%s750 + $0x18] sm:$0xff]
    %756 = vset.pattern.permute.xlu0 0
    %757 = vperm.xlu0 %756, %v751
    %v758 = vpop.permute.xlu0 %757
    %761 = vset.pattern.permute.xlu0 0
    %762 = vperm.xlu0 %761, %v752
    %v763 = vpop.permute.xlu0 %762
    %766 = vset.pattern.permute.xlu0 0
    %767 = vperm.xlu0 %766, %v753
    %v768 = vpop.permute.xlu0 %767
    %771 = vset.pattern.permute.xlu0 0
    %772 = vperm.xlu0 %771, %v754
    %v773 = vpop.permute.xlu0 %772
    %v776 = vsel %vm64, %v746, 0
    %v779 = vsel %vm64, %v747, 0
    %v782 = vsel %vm64, %v748, 0
    %v785 = vsel %vm64, %v749, 0
    %v788 = vsel %vm77, %v743, 0
    %790 = vmatprep.subr.mxu0 0.0
    %791 = vmatpush1.msra.mxu0 %v788
    %792 = vmatprep.subr.mxu0 0.0
    %793 = vmatpush1.msra.mxu0 0.0
    %794 = vmatprep.subr.mxu0 0.0
    %795 = vmatpush1.msra.mxu0 0.0
    %796 = vmatprep.subr.mxu0 0.0
    %797 = vmatpush1.msra.mxu0 0.0
    %798 = vmatprep.subr.mxu0 0.0
    %799 = vmatpush1.msra.mxu0 0.0
    %800 = vmatprep.subr.mxu0 0.0
    %801 = vmatpush1.msra.mxu0 0.0
    %802 = vmatprep.subr.mxu0 0.0
    %803 = vmatpush1.msra.mxu0 0.0
    %804 = vmatprep.subr.mxu0 0.0
    %805 = vmatpush1.msra.mxu0 0.0
    %806 = vmatprep.subr.mxu0 0.0
    %807 = vmatpush1.msra.mxu0 0.0
    %808 = vmatprep.subr.mxu0 0.0
    %809 = vmatpush1.msra.mxu0 0.0
    %810 = vmatprep.subr.mxu0 0.0
    %811 = vmatpush1.msra.mxu0 0.0
    %812 = vmatprep.subr.mxu0 0.0
    %813 = vmatpush1.msra.mxu0 0.0
    %814 = vmatprep.subr.mxu0 0.0
    %815 = vmatpush1.msra.mxu0 0.0
    %816 = vmatprep.subr.mxu0 0.0
    %817 = vmatpush1.msra.mxu0 0.0
    %818 = vmatprep.subr.mxu0 0.0
    %819 = vmatpush1.msra.mxu0 0.0
    %820 = vmatprep.subr.mxu0 0.0
    %821 = vmatpush1.msra.mxu0 0.0
    %822 = vmatprep.subr.mxu0 0.0
    %823 = vmatpush1.msra.mxu0 0.0
    %824 = vmatprep.subr.mxu0 0.0
    %825 = vmatpush1.msra.mxu0 0.0
    %826 = vmatprep.subr.mxu0 0.0
    %827 = vmatpush1.msra.mxu0 0.0
    %828 = vmatprep.subr.mxu0 0.0
    %829 = vmatpush1.msra.mxu0 0.0
    %830 = vmatprep.subr.mxu0 0.0
    %831 = vmatpush1.msra.mxu0 0.0
    %832 = vmatprep.subr.mxu0 0.0
    %833 = vmatpush1.msra.mxu0 0.0
    %834 = vmatprep.subr.mxu0 0.0
    %835 = vmatpush1.msra.mxu0 0.0
    %836 = vmatprep.subr.mxu0 0.0
    %837 = vmatpush1.msra.mxu0 0.0
    %838 = vmatprep.subr.mxu0 0.0
    %839 = vmatpush1.msra.mxu0 0.0
    %840 = vmatprep.subr.mxu0 0.0
    %841 = vmatpush1.msra.mxu0 0.0
    %842 = vmatprep.subr.mxu0 0.0
    %843 = vmatpush1.msra.mxu0 0.0
    %844 = vmatprep.subr.mxu0 0.0
    %845 = vmatpush1.msra.mxu0 0.0
    %846 = vmatprep.subr.mxu0 0.0
    %847 = vmatpush1.msra.mxu0 0.0
    %848 = vmatprep.subr.mxu0 0.0
    %849 = vmatpush1.msra.mxu0 0.0
    %850 = vmatprep.subr.mxu0 0.0
    %851 = vmatpush1.msra.mxu0 0.0
    %852 = vmatprep.subr.mxu0 0.0
    %853 = vmatpush1.msra.mxu0 0.0
    %854 = vmatprep.mubr.f32.mxu0 0.0
    %855 = vmatmul.mubr.f32.gmra.mrb[0].mxu0 %v776
    %v856 = vpop.f32.mrb[0].mxu0
    %v857 = vadd.f32 %v758, %v856
    %v858 = vpop.f32.mrb[0].mxu0
    %859 = vmatprep.mubr.f32.mxu0 0.0
    %860 = vmatmul.mubr.f32.gmra.mrb[0].mxu0 %v779
    %v861 = vpop.f32.mrb[0].mxu0
    %v862 = vadd.f32 %v763, %v861
    %v863 = vpop.f32.mrb[0].mxu0
    %864 = vmatprep.mubr.f32.mxu0 0.0
    %865 = vmatmul.mubr.f32.gmra.mrb[0].mxu0 %v782
    %v866 = vpop.f32.mrb[0].mxu0
    %v867 = vadd.f32 %v768, %v866
    %v868 = vpop.f32.mrb[0].mxu0
    %869 = vmatprep.mubr.f32.mxu0 0.0
    %870 = vmatmul.mubr.f32.gmra.mrb[0].mxu0 %v785
    %v871 = vpop.f32.mrb[0].mxu0
    %v872 = vadd.f32 %v773, %v871
    %v873 = vpop.f32.mrb[0].mxu0
    %874 = vdwg.mxu0
    %v875 = vmax.f32 %v857, 0.0
    %v876 = vmax.f32 %v862, 0.0
    %v877 = vmax.f32 %v867, 0.0
    %v878 = vmax.f32 %v872, 0.0
    %s879 = scalar_lea.vmem %s4, 64
    %v880 = vld [vmem:[%s879] sm:$0xff]
    %v881 = vld [vmem:[%s879 + $0x8] sm:$0xff]
    %v882 = vld [vmem:[%s879 + $0x10] sm:$0xff]
    %v883 = vld [vmem:[%s879 + $0x18] sm:$0xff]
    %s884 = scalar_lea.vmem %s5, 64
    %v885 = vld [vmem:[%s884] sm:$0xff]
    %v886 = vld [vmem:[%s884 + $0x8] sm:$0xff]
    %v887 = vld [vmem:[%s884 + $0x10] sm:$0xff]
    %v888 = vld [vmem:[%s884 + $0x18] sm:$0xff]
    %890 = vset.pattern.permute.xlu0 0
    %891 = vperm.xlu0 %890, %v885
    %v892 = vpop.permute.xlu0 %891
    %895 = vset.pattern.permute.xlu0 0
    %896 = vperm.xlu0 %895, %v886
    %v897 = vpop.permute.xlu0 %896
    %900 = vset.pattern.permute.xlu0 0
    %901 = vperm.xlu0 %900, %v887
    %v902 = vpop.permute.xlu0 %901
    %905 = vset.pattern.permute.xlu0 0
    %906 = vperm.xlu0 %905, %v888
    %v907 = vpop.permute.xlu0 %906
    %v910 = vsel %vm198, %v880, 0
    %v913 = vsel %vm198, %v881, 0
    %v916 = vsel %vm198, %v882, 0
    %v919 = vsel %vm198, %v883, 0
    %921 = vmatprep.subr.mxu0 0.0
    %922 = vmatpush1.msra.mxu0 %v875
    %923 = vmatprep.subr.mxu0 0.0
    %924 = vmatpush1.msra.mxu0 %v876
    %925 = vmatprep.subr.mxu0 0.0
    %926 = vmatpush1.msra.mxu0 %v877
    %927 = vmatprep.subr.mxu0 0.0
    %928 = vmatpush1.msra.mxu0 %v878
    %929 = vmatprep.subr.mxu0 0.0
    %930 = vmatpush1.msra.mxu0 0.0
    %931 = vmatprep.subr.mxu0 0.0
    %932 = vmatpush1.msra.mxu0 0.0
    %933 = vmatprep.subr.mxu0 0.0
    %934 = vmatpush1.msra.mxu0 0.0
    %935 = vmatprep.subr.mxu0 0.0
    %936 = vmatpush1.msra.mxu0 0.0
    %937 = vmatprep.subr.mxu0 0.0
    %938 = vmatpush1.msra.mxu0 0.0
    %939 = vmatprep.subr.mxu0 0.0
    %940 = vmatpush1.msra.mxu0 0.0
    %941 = vmatprep.subr.mxu0 0.0
    %942 = vmatpush1.msra.mxu0 0.0
    %943 = vmatprep.subr.mxu0 0.0
    %944 = vmatpush1.msra.mxu0 0.0
    %945 = vmatprep.subr.mxu0 0.0
    %946 = vmatpush1.msra.mxu0 0.0
    %947 = vmatprep.subr.mxu0 0.0
    %948 = vmatpush1.msra.mxu0 0.0
    %949 = vmatprep.subr.mxu0 0.0
    %950 = vmatpush1.msra.mxu0 0.0
    %951 = vmatprep.subr.mxu0 0.0
    %952 = vmatpush1.msra.mxu0 0.0
    %953 = vmatprep.subr.mxu0 0.0
    %954 = vmatpush1.msra.mxu0 0.0
    %955 = vmatprep.subr.mxu0 0.0
    %956 = vmatpush1.msra.mxu0 0.0
    %957 = vmatprep.subr.mxu0 0.0
    %958 = vmatpush1.msra.mxu0 0.0
    %959 = vmatprep.subr.mxu0 0.0
    %960 = vmatpush1.msra.mxu0 0.0
    %961 = vmatprep.subr.mxu0 0.0
    %962 = vmatpush1.msra.mxu0 0.0
    %963 = vmatprep.subr.mxu0 0.0
    %964 = vmatpush1.msra.mxu0 0.0
    %965 = vmatprep.subr.mxu0 0.0
    %966 = vmatpush1.msra.mxu0 0.0
    %967 = vmatprep.subr.mxu0 0.0
    %968 = vmatpush1.msra.mxu0 0.0
    %969 = vmatprep.subr.mxu0 0.0
    %970 = vmatpush1.msra.mxu0 0.0
    %971 = vmatprep.subr.mxu0 0.0
    %972 = vmatpush1.msra.mxu0 0.0
    %973 = vmatprep.subr.mxu0 0.0
    %974 = vmatpush1.msra.mxu0 0.0
    %975 = vmatprep.subr.mxu0 0.0
    %976 = vmatpush1.msra.mxu0 0.0
    %977 = vmatprep.subr.mxu0 0.0
    %978 = vmatpush1.msra.mxu0 0.0
    %979 = vmatprep.subr.mxu0 0.0
    %980 = vmatpush1.msra.mxu0 0.0
    %981 = vmatprep.subr.mxu0 0.0
    %982 = vmatpush1.msra.mxu0 0.0
    %983 = vmatprep.subr.mxu0 0.0
    %984 = vmatpush1.msra.mxu0 0.0
    %985 = vmatprep.mubr.f32.mxu0 0.0
    %986 = vmatmul.mubr.f32.gmra.mrb[0].mxu0 %v910
    %v987 = vpop.f32.mrb[0].mxu0
    %v988 = vadd.f32 %v892, %v987
    %v989 = vpop.f32.mrb[0].mxu0
    %990 = vmatprep.mubr.f32.mxu0 0.0
    %991 = vmatmul.mubr.f32.gmra.mrb[0].mxu0 %v913
    %v992 = vpop.f32.mrb[0].mxu0
    %v993 = vadd.f32 %v897, %v992
    %v994 = vpop.f32.mrb[0].mxu0
    %995 = vmatprep.mubr.f32.mxu0 0.0
    %996 = vmatmul.mubr.f32.gmra.mrb[0].mxu0 %v916
    %v997 = vpop.f32.mrb[0].mxu0
    %v998 = vadd.f32 %v902, %v997
    %v999 = vpop.f32.mrb[0].mxu0
    %1000 = vmatprep.mubr.f32.mxu0 0.0
    %1001 = vmatmul.mubr.f32.gmra.mrb[0].mxu0 %v919
    %v1002 = vpop.f32.mrb[0].mxu0
    %v1003 = vadd.f32 %v907, %v1002
    %v1004 = vpop.f32.mrb[0].mxu0
    %1005 = vdwg.mxu0
    %v1006 = vmax.f32 %v988, 0.0
    %v1007 = vmax.f32 %v993, 0.0
    %v1008 = vmax.f32 %v998, 0.0
    %v1009 = vmax.f32 %v1003, 0.0
    %s1010 = scalar_lea.vmem %s6, 16
    %v1011 = vld [vmem:[%s1010] sm:$0xff]
    %s1012 = scalar_lea.vmem %s7, 16
    %v1013 = vld [vmem:[%s1012] sm:$0xff]
    %1015 = vset.pattern.permute.xlu0 0
    %1016 = vperm.xlu0 %1015, %v1013
    %v1017 = vpop.permute.xlu0 %1016
    %v1020 = vsel %vm198, %v1011, 0
    %1022 = vmatprep.subr.mxu0 0.0
    %1023 = vmatpush1.msra.mxu0 %v1006
    %1024 = vmatprep.subr.mxu0 0.0
    %1025 = vmatpush1.msra.mxu0 %v1007
    %1026 = vmatprep.subr.mxu0 0.0
    %1027 = vmatpush1.msra.mxu0 %v1008
    %1028 = vmatprep.subr.mxu0 0.0
    %1029 = vmatpush1.msra.mxu0 %v1009
    %1030 = vmatprep.subr.mxu0 0.0
    %1031 = vmatpush1.msra.mxu0 0.0
    %1032 = vmatprep.subr.mxu0 0.0
    %1033 = vmatpush1.msra.mxu0 0.0
    %1034 = vmatprep.subr.mxu0 0.0
    %1035 = vmatpush1.msra.mxu0 0.0
    %1036 = vmatprep.subr.mxu0 0.0
    %1037 = vmatpush1.msra.mxu0 0.0
    %1038 = vmatprep.subr.mxu0 0.0
    %1039 = vmatpush1.msra.mxu0 0.0
    %1040 = vmatprep.subr.mxu0 0.0
    %1041 = vmatpush1.msra.mxu0 0.0
    %1042 = vmatprep.subr.mxu0 0.0
    %1043 = vmatpush1.msra.mxu0 0.0
    %1044 = vmatprep.subr.mxu0 0.0
    %1045 = vmatpush1.msra.mxu0 0.0
    %1046 = vmatprep.subr.mxu0 0.0
    %1047 = vmatpush1.msra.mxu0 0.0
    %1048 = vmatprep.subr.mxu0 0.0
    %1049 = vmatpush1.msra.mxu0 0.0
    %1050 = vmatprep.subr.mxu0 0.0
    %1051 = vmatpush1.msra.mxu0 0.0
    %1052 = vmatprep.subr.mxu0 0.0
    %1053 = vmatpush1.msra.mxu0 0.0
    %1054 = vmatprep.subr.mxu0 0.0
    %1055 = vmatpush1.msra.mxu0 0.0
    %1056 = vmatprep.subr.mxu0 0.0
    %1057 = vmatpush1.msra.mxu0 0.0
    %1058 = vmatprep.subr.mxu0 0.0
    %1059 = vmatpush1.msra.mxu0 0.0
    %1060 = vmatprep.subr.mxu0 0.0
    %1061 = vmatpush1.msra.mxu0 0.0
    %1062 = vmatprep.subr.mxu0 0.0
    %1063 = vmatpush1.msra.mxu0 0.0
    %1064 = vmatprep.subr.mxu0 0.0
    %1065 = vmatpush1.msra.mxu0 0.0
    %1066 = vmatprep.subr.mxu0 0.0
    %1067 = vmatpush1.msra.mxu0 0.0
    %1068 = vmatprep.subr.mxu0 0.0
    %1069 = vmatpush1.msra.mxu0 0.0
    %1070 = vmatprep.subr.mxu0 0.0
    %1071 = vmatpush1.msra.mxu0 0.0
    %1072 = vmatprep.subr.mxu0 0.0
    %1073 = vmatpush1.msra.mxu0 0.0
    %1074 = vmatprep.subr.mxu0 0.0
    %1075 = vmatpush1.msra.mxu0 0.0
    %1076 = vmatprep.subr.mxu0 0.0
    %1077 = vmatpush1.msra.mxu0 0.0
    %1078 = vmatprep.subr.mxu0 0.0
    %1079 = vmatpush1.msra.mxu0 0.0
    %1080 = vmatprep.subr.mxu0 0.0
    %1081 = vmatpush1.msra.mxu0 0.0
    %1082 = vmatprep.subr.mxu0 0.0
    %1083 = vmatpush1.msra.mxu0 0.0
    %1084 = vmatprep.subr.mxu0 0.0
    %1085 = vmatpush1.msra.mxu0 0.0
    %1086 = vmatprep.mubr.f32.mxu0 0.0
    %1087 = vmatmul.mubr.f32.gmra.mrb[0].mxu0 %v1020
    %v1088 = vpop.f32.mrb[0].mxu0
    %v1089 = vadd.f32 %v1017, %v1088
    %v1090 = vpop.f32.mrb[0].mxu0
    %1091 = vdwg.mxu0
    %v1092 = vtanh.pop %v1089
    %v1093 = vmul.f32 %v1092, 1.442695
    %v1094 = vpow.pop %v1093
    %v1095 = vmul.f32 %v1094, %v387
    %v1097 = vrot.slane %v1089, 4
    %v1099 = vadd.f32 %v1095, %v1097
    %v1100 = vadd.f32 %v744, %v1092
    %s1101 = scalar_lea.vmem %s2, 96
    %v1102 = vld [vmem:[%s1101] sm:$0xff]
    %v1103 = vld [vmem:[%s1101 + $0x8] sm:$0xff]
    %v1104 = vld [vmem:[%s1101 + $0x10] sm:$0xff]
    %v1105 = vld [vmem:[%s1101 + $0x18] sm:$0xff]
    %s1106 = scalar_lea.vmem %s3, 96
    %v1107 = vld [vmem:[%s1106] sm:$0xff]
    %v1108 = vld [vmem:[%s1106 + $0x8] sm:$0xff]
    %v1109 = vld [vmem:[%s1106 + $0x10] sm:$0xff]
    %v1110 = vld [vmem:[%s1106 + $0x18] sm:$0xff]
    %1112 = vset.pattern.permute.xlu0 0
    %1113 = vperm.xlu0 %1112, %v1107
    %v1114 = vpop.permute.xlu0 %1113
    %1117 = vset.pattern.permute.xlu0 0
    %1118 = vperm.xlu0 %1117, %v1108
    %v1119 = vpop.permute.xlu0 %1118
    %1122 = vset.pattern.permute.xlu0 0
    %1123 = vperm.xlu0 %1122, %v1109
    %v1124 = vpop.permute.xlu0 %1123
    %1127 = vset.pattern.permute.xlu0 0
    %1128 = vperm.xlu0 %1127, %v1110
    %v1129 = vpop.permute.xlu0 %1128
    %v1132 = vsel %vm64, %v1102, 0
    %v1135 = vsel %vm64, %v1103, 0
    %v1138 = vsel %vm64, %v1104, 0
    %v1141 = vsel %vm64, %v1105, 0
    %v1144 = vsel %vm77, %v1099, 0
    %1146 = vmatprep.subr.mxu0 0.0
    %1147 = vmatpush1.msra.mxu0 %v1144
    %1148 = vmatprep.subr.mxu0 0.0
    %1149 = vmatpush1.msra.mxu0 0.0
    %1150 = vmatprep.subr.mxu0 0.0
    %1151 = vmatpush1.msra.mxu0 0.0
    %1152 = vmatprep.subr.mxu0 0.0
    %1153 = vmatpush1.msra.mxu0 0.0
    %1154 = vmatprep.subr.mxu0 0.0
    %1155 = vmatpush1.msra.mxu0 0.0
    %1156 = vmatprep.subr.mxu0 0.0
    %1157 = vmatpush1.msra.mxu0 0.0
    %1158 = vmatprep.subr.mxu0 0.0
    %1159 = vmatpush1.msra.mxu0 0.0
    %1160 = vmatprep.subr.mxu0 0.0
    %1161 = vmatpush1.msra.mxu0 0.0
    %1162 = vmatprep.subr.mxu0 0.0
    %1163 = vmatpush1.msra.mxu0 0.0
    %1164 = vmatprep.subr.mxu0 0.0
    %1165 = vmatpush1.msra.mxu0 0.0
    %1166 = vmatprep.subr.mxu0 0.0
    %1167 = vmatpush1.msra.mxu0 0.0
    %1168 = vmatprep.subr.mxu0 0.0
    %1169 = vmatpush1.msra.mxu0 0.0
    %1170 = vmatprep.subr.mxu0 0.0
    %1171 = vmatpush1.msra.mxu0 0.0
    %1172 = vmatprep.subr.mxu0 0.0
    %1173 = vmatpush1.msra.mxu0 0.0
    %1174 = vmatprep.subr.mxu0 0.0
    %1175 = vmatpush1.msra.mxu0 0.0
    %1176 = vmatprep.subr.mxu0 0.0
    %1177 = vmatpush1.msra.mxu0 0.0
    %1178 = vmatprep.subr.mxu0 0.0
    %1179 = vmatpush1.msra.mxu0 0.0
    %1180 = vmatprep.subr.mxu0 0.0
    %1181 = vmatpush1.msra.mxu0 0.0
    %1182 = vmatprep.subr.mxu0 0.0
    %1183 = vmatpush1.msra.mxu0 0.0
    %1184 = vmatprep.subr.mxu0 0.0
    %1185 = vmatpush1.msra.mxu0 0.0
    %1186 = vmatprep.subr.mxu0 0.0
    %1187 = vmatpush1.msra.mxu0 0.0
    %1188 = vmatprep.subr.mxu0 0.0
    %1189 = vmatpush1.msra.mxu0 0.0
    %1190 = vmatprep.subr.mxu0 0.0
    %1191 = vmatpush1.msra.mxu0 0.0
    %1192 = vmatprep.subr.mxu0 0.0
    %1193 = vmatpush1.msra.mxu0 0.0
    %1194 = vmatprep.subr.mxu0 0.0
    %1195 = vmatpush1.msra.mxu0 0.0
    %1196 = vmatprep.subr.mxu0 0.0
    %1197 = vmatpush1.msra.mxu0 0.0
    %1198 = vmatprep.subr.mxu0 0.0
    %1199 = vmatpush1.msra.mxu0 0.0
    %1200 = vmatprep.subr.mxu0 0.0
    %1201 = vmatpush1.msra.mxu0 0.0
    %1202 = vmatprep.subr.mxu0 0.0
    %1203 = vmatpush1.msra.mxu0 0.0
    %1204 = vmatprep.subr.mxu0 0.0
    %1205 = vmatpush1.msra.mxu0 0.0
    %1206 = vmatprep.subr.mxu0 0.0
    %1207 = vmatpush1.msra.mxu0 0.0
    %1208 = vmatprep.subr.mxu0 0.0
    %1209 = vmatpush1.msra.mxu0 0.0
    %1210 = vmatprep.mubr.f32.mxu0 0.0
    %1211 = vmatmul.mubr.f32.gmra.mrb[0].mxu0 %v1132
    %v1212 = vpop.f32.mrb[0].mxu0
    %v1213 = vadd.f32 %v1114, %v1212
    %v1214 = vpop.f32.mrb[0].mxu0
    %1215 = vmatprep.mubr.f32.mxu0 0.0
    %1216 = vmatmul.mubr.f32.gmra.mrb[0].mxu0 %v1135
    %v1217 = vpop.f32.mrb[0].mxu0
    %v1218 = vadd.f32 %v1119, %v1217
    %v1219 = vpop.f32.mrb[0].mxu0
    %1220 = vmatprep.mubr.f32.mxu0 0.0
    %1221 = vmatmul.mubr.f32.gmra.mrb[0].mxu0 %v1138
    %v1222 = vpop.f32.mrb[0].mxu0
    %v1223 = vadd.f32 %v1124, %v1222
    %v1224 = vpop.f32.mrb[0].mxu0
    %1225 = vmatprep.mubr.f32.mxu0 0.0
    %1226 = vmatmul.mubr.f32.gmra.mrb[0].mxu0 %v1141
    %v1227 = vpop.f32.mrb[0].mxu0
    %v1228 = vadd.f32 %v1129, %v1227
    %v1229 = vpop.f32.mrb[0].mxu0
    %1230 = vdwg.mxu0
    %v1231 = vmax.f32 %v1213, 0.0
    %v1232 = vmax.f32 %v1218, 0.0
    %v1233 = vmax.f32 %v1223, 0.0
    %v1234 = vmax.f32 %v1228, 0.0
    %s1235 = scalar_lea.vmem %s4, 96
    %v1236 = vld [vmem:[%s1235] sm:$0xff]
    %v1237 = vld [vmem:[%s1235 + $0x8] sm:$0xff]
    %v1238 = vld [vmem:[%s1235 + $0x10] sm:$0xff]
    %v1239 = vld [vmem:[%s1235 + $0x18] sm:$0xff]
    %s1240 = scalar_lea.vmem %s5, 96
    %v1241 = vld [vmem:[%s1240] sm:$0xff]
    %v1242 = vld [vmem:[%s1240 + $0x8] sm:$0xff]
    %v1243 = vld [vmem:[%s1240 + $0x10] sm:$0xff]
    %v1244 = vld [vmem:[%s1240 + $0x18] sm:$0xff]
    %1246 = vset.pattern.permute.xlu0 0
    %1247 = vperm.xlu0 %1246, %v1241
    %v1248 = vpop.permute.xlu0 %1247
    %1251 = vset.pattern.permute.xlu0 0
    %1252 = vperm.xlu0 %1251, %v1242
    %v1253 = vpop.permute.xlu0 %1252
    %1256 = vset.pattern.permute.xlu0 0
    %1257 = vperm.xlu0 %1256, %v1243
    %v1258 = vpop.permute.xlu0 %1257
    %1261 = vset.pattern.permute.xlu0 0
    %1262 = vperm.xlu0 %1261, %v1244
    %v1263 = vpop.permute.xlu0 %1262
    %v1266 = vsel %vm198, %v1236, 0
    %v1269 = vsel %vm198, %v1237, 0
    %v1272 = vsel %vm198, %v1238, 0
    %v1275 = vsel %vm198, %v1239, 0
    %1277 = vmatprep.subr.mxu0 0.0
    %1278 = vmatpush1.msra.mxu0 %v1231
    %1279 = vmatprep.subr.mxu0 0.0
    %1280 = vmatpush1.msra.mxu0 %v1232
    %1281 = vmatprep.subr.mxu0 0.0
    %1282 = vmatpush1.msra.mxu0 %v1233
    %1283 = vmatprep.subr.mxu0 0.0
    %1284 = vmatpush1.msra.mxu0 %v1234
    %1285 = vmatprep.subr.mxu0 0.0
    %1286 = vmatpush1.msra.mxu0 0.0
    %1287 = vmatprep.subr.mxu0 0.0
    %1288 = vmatpush1.msra.mxu0 0.0
    %1289 = vmatprep.subr.mxu0 0.0
    %1290 = vmatpush1.msra.mxu0 0.0
    %1291 = vmatprep.subr.mxu0 0.0
    %1292 = vmatpush1.msra.mxu0 0.0
    %1293 = vmatprep.subr.mxu0 0.0
    %1294 = vmatpush1.msra.mxu0 0.0
    %1295 = vmatprep.subr.mxu0 0.0
    %1296 = vmatpush1.msra.mxu0 0.0
    %1297 = vmatprep.subr.mxu0 0.0
    %1298 = vmatpush1.msra.mxu0 0.0
    %1299 = vmatprep.subr.mxu0 0.0
    %1300 = vmatpush1.msra.mxu0 0.0
    %1301 = vmatprep.subr.mxu0 0.0
    %1302 = vmatpush1.msra.mxu0 0.0
    %1303 = vmatprep.subr.mxu0 0.0
    %1304 = vmatpush1.msra.mxu0 0.0
    %1305 = vmatprep.subr.mxu0 0.0
    %1306 = vmatpush1.msra.mxu0 0.0
    %1307 = vmatprep.subr.mxu0 0.0
    %1308 = vmatpush1.msra.mxu0 0.0
    %1309 = vmatprep.subr.mxu0 0.0
    %1310 = vmatpush1.msra.mxu0 0.0
    %1311 = vmatprep.subr.mxu0 0.0
    %1312 = vmatpush1.msra.mxu0 0.0
    %1313 = vmatprep.subr.mxu0 0.0
    %1314 = vmatpush1.msra.mxu0 0.0
    %1315 = vmatprep.subr.mxu0 0.0
    %1316 = vmatpush1.msra.mxu0 0.0
    %1317 = vmatprep.subr.mxu0 0.0
    %1318 = vmatpush1.msra.mxu0 0.0
    %1319 = vmatprep.subr.mxu0 0.0
    %1320 = vmatpush1.msra.mxu0 0.0
    %1321 = vmatprep.subr.mxu0 0.0
    %1322 = vmatpush1.msra.mxu0 0.0
    %1323 = vmatprep.subr.mxu0 0.0
    %1324 = vmatpush1.msra.mxu0 0.0
    %1325 = vmatprep.subr.mxu0 0.0
    %1326 = vmatpush1.msra.mxu0 0.0
    %1327 = vmatprep.subr.mxu0 0.0
    %1328 = vmatpush1.msra.mxu0 0.0
    %1329 = vmatprep.subr.mxu0 0.0
    %1330 = vmatpush1.msra.mxu0 0.0
    %1331 = vmatprep.subr.mxu0 0.0
    %1332 = vmatpush1.msra.mxu0 0.0
    %1333 = vmatprep.subr.mxu0 0.0
    %1334 = vmatpush1.msra.mxu0 0.0
    %1335 = vmatprep.subr.mxu0 0.0
    %1336 = vmatpush1.msra.mxu0 0.0
    %1337 = vmatprep.subr.mxu0 0.0
    %1338 = vmatpush1.msra.mxu0 0.0
    %1339 = vmatprep.subr.mxu0 0.0
    %1340 = vmatpush1.msra.mxu0 0.0
    %1341 = vmatprep.mubr.f32.mxu0 0.0
    %1342 = vmatmul.mubr.f32.gmra.mrb[0].mxu0 %v1266
    %v1343 = vpop.f32.mrb[0].mxu0
    %v1344 = vadd.f32 %v1248, %v1343
    %v1345 = vpop.f32.mrb[0].mxu0
    %1346 = vmatprep.mubr.f32.mxu0 0.0
    %1347 = vmatmul.mubr.f32.gmra.mrb[0].mxu0 %v1269
    %v1348 = vpop.f32.mrb[0].mxu0
    %v1349 = vadd.f32 %v1253, %v1348
    %v1350 = vpop.f32.mrb[0].mxu0
    %1351 = vmatprep.mubr.f32.mxu0 0.0
    %1352 = vmatmul.mubr.f32.gmra.mrb[0].mxu0 %v1272
    %v1353 = vpop.f32.mrb[0].mxu0
    %v1354 = vadd.f32 %v1258, %v1353
    %v1355 = vpop.f32.mrb[0].mxu0
    %1356 = vmatprep.mubr.f32.mxu0 0.0
    %1357 = vmatmul.mubr.f32.gmra.mrb[0].mxu0 %v1275
    %v1358 = vpop.f32.mrb[0].mxu0
    %v1359 = vadd.f32 %v1263, %v1358
    %v1360 = vpop.f32.mrb[0].mxu0
    %1361 = vdwg.mxu0
    %v1362 = vmax.f32 %v1344, 0.0
    %v1363 = vmax.f32 %v1349, 0.0
    %v1364 = vmax.f32 %v1354, 0.0
    %v1365 = vmax.f32 %v1359, 0.0
    %s1366 = scalar_lea.vmem %s6, 24
    %v1367 = vld [vmem:[%s1366] sm:$0xff]
    %s1368 = scalar_lea.vmem %s7, 24
    %v1369 = vld [vmem:[%s1368] sm:$0xff]
    %1371 = vset.pattern.permute.xlu0 0
    %1372 = vperm.xlu0 %1371, %v1369
    %v1373 = vpop.permute.xlu0 %1372
    %v1376 = vsel %vm198, %v1367, 0
    %1378 = vmatprep.subr.mxu0 0.0
    %1379 = vmatpush1.msra.mxu0 %v1362
    %1380 = vmatprep.subr.mxu0 0.0
    %1381 = vmatpush1.msra.mxu0 %v1363
    %1382 = vmatprep.subr.mxu0 0.0
    %1383 = vmatpush1.msra.mxu0 %v1364
    %1384 = vmatprep.subr.mxu0 0.0
    %1385 = vmatpush1.msra.mxu0 %v1365
    %1386 = vmatprep.subr.mxu0 0.0
    %1387 = vmatpush1.msra.mxu0 0.0
    %1388 = vmatprep.subr.mxu0 0.0
    %1389 = vmatpush1.msra.mxu0 0.0
    %1390 = vmatprep.subr.mxu0 0.0
    %1391 = vmatpush1.msra.mxu0 0.0
    %1392 = vmatprep.subr.mxu0 0.0
    %1393 = vmatpush1.msra.mxu0 0.0
    %1394 = vmatprep.subr.mxu0 0.0
    %1395 = vmatpush1.msra.mxu0 0.0
    %1396 = vmatprep.subr.mxu0 0.0
    %1397 = vmatpush1.msra.mxu0 0.0
    %1398 = vmatprep.subr.mxu0 0.0
    %1399 = vmatpush1.msra.mxu0 0.0
    %1400 = vmatprep.subr.mxu0 0.0
    %1401 = vmatpush1.msra.mxu0 0.0
    %1402 = vmatprep.subr.mxu0 0.0
    %1403 = vmatpush1.msra.mxu0 0.0
    %1404 = vmatprep.subr.mxu0 0.0
    %1405 = vmatpush1.msra.mxu0 0.0
    %1406 = vmatprep.subr.mxu0 0.0
    %1407 = vmatpush1.msra.mxu0 0.0
    %1408 = vmatprep.subr.mxu0 0.0
    %1409 = vmatpush1.msra.mxu0 0.0
    %1410 = vmatprep.subr.mxu0 0.0
    %1411 = vmatpush1.msra.mxu0 0.0
    %1412 = vmatprep.subr.mxu0 0.0
    %1413 = vmatpush1.msra.mxu0 0.0
    %1414 = vmatprep.subr.mxu0 0.0
    %1415 = vmatpush1.msra.mxu0 0.0
    %1416 = vmatprep.subr.mxu0 0.0
    %1417 = vmatpush1.msra.mxu0 0.0
    %1418 = vmatprep.subr.mxu0 0.0
    %1419 = vmatpush1.msra.mxu0 0.0
    %1420 = vmatprep.subr.mxu0 0.0
    %1421 = vmatpush1.msra.mxu0 0.0
    %1422 = vmatprep.subr.mxu0 0.0
    %1423 = vmatpush1.msra.mxu0 0.0
    %1424 = vmatprep.subr.mxu0 0.0
    %1425 = vmatpush1.msra.mxu0 0.0
    %1426 = vmatprep.subr.mxu0 0.0
    %1427 = vmatpush1.msra.mxu0 0.0
    %1428 = vmatprep.subr.mxu0 0.0
    %1429 = vmatpush1.msra.mxu0 0.0
    %1430 = vmatprep.subr.mxu0 0.0
    %1431 = vmatpush1.msra.mxu0 0.0
    %1432 = vmatprep.subr.mxu0 0.0
    %1433 = vmatpush1.msra.mxu0 0.0
    %1434 = vmatprep.subr.mxu0 0.0
    %1435 = vmatpush1.msra.mxu0 0.0
    %1436 = vmatprep.subr.mxu0 0.0
    %1437 = vmatpush1.msra.mxu0 0.0
    %1438 = vmatprep.subr.mxu0 0.0
    %1439 = vmatpush1.msra.mxu0 0.0
    %1440 = vmatprep.subr.mxu0 0.0
    %1441 = vmatpush1.msra.mxu0 0.0
    %1442 = vmatprep.mubr.f32.mxu0 0.0
    %1443 = vmatmul.mubr.f32.gmra.mrb[0].mxu0 %v1376
    %v1444 = vpop.f32.mrb[0].mxu0
    %v1445 = vadd.f32 %v1373, %v1444
    %v1446 = vpop.f32.mrb[0].mxu0
    %1447 = vdwg.mxu0
    %v1448 = vtanh.pop %v1445
    %v1449 = vmul.f32 %v1448, 1.442695
    %v1450 = vpow.pop %v1449
    %v1451 = vmul.f32 %v1450, %v743
    %v1453 = vrot.slane %v1445, 4
    %v1455 = vadd.f32 %v1451, %v1453
    %v1456 = vadd.f32 %v1100, %v1448
    %1457 = vst [vmem:[#allocation2] sm:$0xf] %v1455
    %1458 = vst [vmem:[#allocation4] sm:$0xf] %v1099
    %1459 = vst [vmem:[#allocation6] sm:$0xf] %v1456
    // Predicated region
    $region34: #{tpu_custom_call.1} parent=1 // pred_check
      _
    $region35: #{tpu_custom_call.1} parent=1 // pred_check_branch
      %1461 = sbr.rel (0) target = $region37
    $region36: #{tpu_custom_call.1} parent=1 // pred_region
      %s1463 = ssub.s32 64, 64
      %1464 = vsyncadd [#allocation3], %s1463
      %s1466 = sshll.u32 [#allocation2], 4
      %s1467 = int_to_ptr.vmem [resolvable:$true] %s1466
      %1469 = dma.vmem_to_hbm [thread:$0]  %s1467, 64, %s8, [#allocation3]
    $region37: #{tpu_custom_call.1} parent=1 // pred_fallthru
      _
    // Predicated region
    $region38: #{tpu_custom_call.1} parent=1 // pred_check
      _
    $region39: #{tpu_custom_call.1} parent=1 // pred_check_branch
      %1471 = sbr.rel (0) target = $region41
    $region40: #{tpu_custom_call.1} parent=1 // pred_region
      %s1473 = ssub.s32 64, 64
      %1474 = vsyncadd [#allocation5], %s1473
      %s1476 = sshll.u32 [#allocation4], 4
      %s1477 = int_to_ptr.vmem [resolvable:$true] %s1476
      %1479 = dma.vmem_to_hbm [thread:$0]  %s1477, 64, %s9, [#allocation5]
    $region41: #{tpu_custom_call.1} parent=1 // pred_fallthru
      _
    // Predicated region
    $region42: #{tpu_custom_call.1} parent=1 // pred_check
      _
    $region43: #{tpu_custom_call.1} parent=1 // pred_check_branch
      %1481 = sbr.rel (0) target = $region45
    $region44: #{tpu_custom_call.1} parent=1 // pred_region
      %s1483 = ssub.s32 64, 64
      %1484 = vsyncadd [#allocation5], %s1483
      %s1486 = sshll.u32 [#allocation6], 4
      %s1487 = int_to_ptr.vmem [resolvable:$true] %s1486
      %1489 = dma.vmem_to_hbm [thread:$0]  %s1487, 64, %s10, [#allocation5]
    $region45: #{tpu_custom_call.1} parent=1 // pred_fallthru
      _
    // Predicated region
    $region46: #{tpu_custom_call.1} parent=1 // pred_check
      _
    $region47: #{tpu_custom_call.1} parent=1 // pred_check_branch
      %1491 = sbr.rel (0) target = $region49
    $region48: #{tpu_custom_call.1} parent=1 // pred_region
      %1492 = dma.done [#allocation3], 64
    $region49: #{tpu_custom_call.1} parent=1 // pred_fallthru
      _
    // Predicated region
    $region50: #{tpu_custom_call.1} parent=1 // pred_check
      _
    $region51: #{tpu_custom_call.1} parent=1 // pred_check_branch
      %1494 = sbr.rel (0) target = $region53
    $region52: #{tpu_custom_call.1} parent=1 // pred_region
      %1495 = dma.done [#allocation5], 64
    $region53: #{tpu_custom_call.1} parent=1 // pred_fallthru
      _
    // Predicated region
    $region54: #{tpu_custom_call.1} parent=1 // pred_check
      _
    $region55: #{tpu_custom_call.1} parent=1 // pred_check_branch
      %1497 = sbr.rel (0) target = $region57
    $region56: #{tpu_custom_call.1} parent=1 // pred_region
      %1498 = dma.done [#allocation5], 64
    $region57: #{tpu_custom_call.1} parent=1 // pred_fallthru
      _
    %1499 = vsyncpa [#allocation3], 1
    %1500 = vsyncpa [#allocation5], 1

</llo_original>
